<compile_context>
chip_gen: v7x
topology: tpu7x:2x2x1
jax: 0.10.0
libtpu: 0.0.40
codegen_flags: <defaults>
</compile_context>

<pallas_src>
from functools import partial

import jax
import jax.numpy as jnp
from jax.experimental import pallas as pl
from jax.experimental.pallas import tpu as pltpu


def _attn_kernel(x_ref, w_ref, b_ref, m_ref, o_ref, *, n_heads):
    """One batch element per grid step; heads stacked on the sublane axis."""
    H = n_heads
    HS = x_ref.shape[1]            # H * S
    S = HS // H
    HD = w_ref.shape[1] // 3       # H * Dh

    x = x_ref[0]                   # (H*S, H*F)  bf16, block-diagonal over heads
    w = w_ref[...]                 # (H*F, 3*HD) bf16, packed (Q pre-scaled)
    b = b_ref[...]                 # (H*S, 3*HD) f32

    # Fused block-diagonal projection: one bf16 MXU matmul (f32 accumulate)
    # yields head-stacked Q, K and head-spread V (already in the module's
    # d*H + h column layout).
    qkv = jnp.dot(x, w, preferred_element_type=jnp.float32) + b
    qkv = qkv.astype(jnp.bfloat16)                 # single hoisted bf16 cast
    q = qkv[:, :HD]                                # (H*S, HD)
    k = qkv[:, HD:2 * HD]                          # (H*S, HD)
    v = qkv[:, 2 * HD:]                            # (H*S, HD)

    # One stacked scores matmul: q @ k^T without materializing a transpose.
    s = jax.lax.dot_general(q, k, dimension_numbers=(((1,), (1,)), ((), ())),
                            preferred_element_type=jnp.float32)    # (H*S, H*S)

    # Combined mask values: 0 -> keep, -inf -> masked by A, -2*inf -> other
    # head's block.  Selecting (not adding) keeps exact masked_fill semantics,
    # including uniform attention on fully-masked rows (matches the module).
    mb = m_ref[0]                                                   # (H*S, H*S)
    s = jnp.where(mb == 0.0, s, mb)

    # Softmax over the lane-dense last axis; normalization goes to the EUP.
    m = jnp.max(s, axis=-1, keepdims=True)
    e = jnp.exp(s - m)
    p = e * pl.reciprocal(jnp.sum(e, axis=-1, keepdims=True), approx=True)

    y = jnp.dot(p.astype(jnp.bfloat16), v,
                preferred_element_type=jnp.float32)                 # (H*S, HD)

    # Head-row blocks have disjoint column support (V was head-spread), so
    # collapsing them with adds is exact and already in module (d*H+h) layout.
    out = y[:S]
    for h in range(1, H):
        out = out + y[h * S:(h + 1) * S]
    o_ref[0] = out


def _pack_qkv_params(W, b, n_heads, seq_len):
    """Repack the torch Linear(QKV) weights for the head-stacked kernel.

    In real use this runs ONCE at module init (it depends only on the
    weights), not per forward call.
    """
    H = n_heads
    Dh = W.shape[0] // (3 * H)
    F = W.shape[1]
    HD = H * Dh

    # torch Linear output channel c = d*(3H) + qkv*H + h (module reshapes the
    # projection to (..., Dh, 3, H)).  Fold 1/sqrt(n_heads) into the Q block.
    scale = jnp.array([1.0 / (H ** 0.5), 1.0, 1.0], jnp.float32)
    eye_h = jnp.eye(H, dtype=jnp.float32)

    Wr = W.reshape(Dh, 3, H, F) * scale[None, :, None, None]       # [d,qkv,h,f]
    # Block-diagonal over heads; output columns spread to d*H + h.
    Wb = jnp.einsum('dqhf,hg->qhfdg', Wr, eye_h).reshape(3, H * F, HD)
    W_aug = jnp.concatenate([Wb[0], Wb[1], Wb[2]], axis=-1)        # (H*F, 3*HD)

    br = b.reshape(Dh, 3, H) * scale[None, :, None]                # [d,qkv,h]
    bb = jnp.einsum('dqh,hg->qhdg', br, eye_h).reshape(3, H, HD)
    bb = jnp.concatenate([bb[0], bb[1], bb[2]], axis=-1)           # (H, 3*HD)
    b_aug = jnp.repeat(bb, seq_len, axis=0)                        # (H*S, 3*HD)

    return W_aug.astype(jnp.bfloat16), b_aug.astype(jnp.float32)


def attention_pallas(X, A, W, b, n_heads, inf=1e9):
    """X: (B,S,F) f32; A: (B,S,S) bool; W: (Dh*3*H, F); b: (Dh*3*H,)."""
    B, S, F = X.shape
    H = n_heads
    Dh = W.shape[0] // (3 * H)
    HD = H * Dh
    HS = H * S
    HF = H * F

    # Init-time packing (weights only) -- hoist out of the hot path in real use.
    W_aug, b_aug = _pack_qkv_params(W, b, H, S)

    # Replicate X into a block-diagonal-over-heads stacked layout (bf16).
    eye_h = jnp.eye(H, dtype=X.dtype)
    X_aug = jnp.einsum('bsf,hg->bhsgf', X, eye_h).reshape(B, HS, HF)
    X_aug = X_aug.astype(jnp.bfloat16)

    # Combined mask values: 0 keep, -inf masked (A), -2*inf other-head block
    # (strictly more negative so fully-masked rows normalize within their own
    # head block, exactly like the module).
    neg = jnp.float32(-float(inf))
    blk = jnp.arange(HS) // S
    same_head = blk[:, None] == blk[None, :]                        # (HS, HS)
    in_blk = jnp.where(A, jnp.float32(0.0), neg)                    # (B, S, S)
    mask_big = jnp.where(same_head[None], jnp.tile(in_blk, (1, H, H)),
                         jnp.float32(2.0) * neg)                    # (B, HS, HS)

    kernel = partial(_attn_kernel, n_heads=H)

    out = pl.pallas_call(
        kernel,
        out_shape=jax.ShapeDtypeStruct((B, S, HD), jnp.float32),
        grid_spec=pltpu.PrefetchScalarGridSpec(
            num_scalar_prefetch=0,
            grid=(B,),
            in_specs=[
                pl.BlockSpec((1, HS, HF), lambda bi: (bi, 0, 0)),    # X_aug
                pl.BlockSpec((HF, 3 * HD), lambda bi: (0, 0)),       # W_aug (resident)
                pl.BlockSpec((HS, 3 * HD), lambda bi: (0, 0)),       # bias  (resident)
                pl.BlockSpec((1, HS, HS), lambda bi: (bi, 0, 0)),    # mask
            ],
            out_specs=pl.BlockSpec((1, S, HD), lambda bi: (bi, 0, 0)),
        ),
        compiler_params=pltpu.CompilerParams(
            dimension_semantics=("parallel",)),
    )(X_aug, W_aug, b_aug, mask_big)

    # Output is (B, S, Dh*H) with column index d*H + h (module layout).
    return out


def attention_ref(X, A, W, b, n_heads, inf=1e9):
    """Pure-JAX transliteration of the PyTorch forward (for validation)."""
    HI = jax.lax.Precision.HIGHEST
    B, S, F = X.shape
    H = n_heads
    Dh = W.shape[0] // (3 * H)
    QKV = jnp.einsum('bsf,of->bso', X, W, precision=HI) + b
    QKV = QKV.reshape(B, S, Dh, 3, H)
    QKV = jnp.transpose(QKV, (3, 4, 0, 1, 2))          # (3, H, B, S, Dh)
    Q, K, V = QKV[0], QKV[1], QKV[2]
    qkt = jnp.einsum('hbsd,hbtd->hbst', Q, K, precision=HI) / (H ** 0.5)
    qkt = jnp.where(A[None], qkt, -inf)                 # broadcast over heads
    P = jax.nn.softmax(qkt, axis=-1)
    Y = jnp.einsum('hbst,hbtd->hbsd', P, V, precision=HI)
    Y = jnp.transpose(Y, (1, 2, 3, 0)).reshape(B, S, Dh * H)
    return Y


if __name__ == "__main__":
    B, S = 2, 16
    n_features = 32
    n_hidden = 16          # per-head hidden dim
    n_heads = 8            # module default; H*Dh = 128, H*S = 128

    key = jax.random.PRNGKey(0)
    kx, kw, kb, ka = jax.random.split(key, 4)

    X = jax.random.normal(kx, (B, S, n_features), dtype=jnp.float32)
    W = 0.1 * jax.random.normal(kw, (n_hidden * 3 * n_heads, n_features),
                                dtype=jnp.float32)
    b = 0.01 * jax.random.normal(kb, (n_hidden * 3 * n_heads,),
                                 dtype=jnp.float32)
    # Boolean attention mask; diagonal forced True so every row attends to at
    # least one position.
    A = (jax.random.uniform(ka, (B, S, S)) > 0.3) | jnp.eye(S, dtype=bool)[None]

    Y = attention_pallas(X, A, W, b, n_heads)
    Y = jax.block_until_ready(Y)

    Y_ref = attention_ref(X, A, W, b, n_heads)
    assert Y.shape == (B, S, n_hidden * n_heads)
    assert jnp.allclose(Y, Y_ref, atol=2e-2, rtol=2e-2), (
        float(jnp.max(jnp.abs(Y - Y_ref))))

    print("KERNEL_OK")
</pallas_src>

<mosaic_0001>
module attributes {stable_mosaic.version = 11 : i64} {
  func.func @_attn_kernel(%arg0: i32, %arg1: memref<1x128x256xbf16, #tpu.memory_space<vmem>>, %arg2: memref<256x384xbf16, #tpu.memory_space<vmem>>, %arg3: memref<128x384xf32, #tpu.memory_space<vmem>>, %arg4: memref<1x128x128xf32, #tpu.memory_space<vmem>>, %arg5: memref<1x16x128xf32, #tpu.memory_space<vmem>>) attributes {dimension_semantics = [#tpu.dimension_semantics<parallel>], iteration_bounds = array<i64: 2>, scalar_prefetch = 0 : i64, scratch_operands = 0 : i64, tpu.core_type = #tpu.core_type<tc>, window_params = [{transform_indices = @transform_0, window_bounds = array<i64: 1, 128, 256>}, {pipeline_mode = #tpu.pipeline_mode<synchronous>, transform_indices = @transform_1, window_bounds = array<i64: 256, 384>}, {pipeline_mode = #tpu.pipeline_mode<synchronous>, transform_indices = @transform_2, window_bounds = array<i64: 128, 384>}, {transform_indices = @transform_3, window_bounds = array<i64: 1, 128, 128>}, {transform_indices = @transform_4, window_bounds = array<i64: 1, 16, 128>}]} {
    %c0 = arith.constant 0 : index
    %c0_0 = arith.constant 0 : index
    %c0_1 = arith.constant 0 : index
    %0 = vector.load %arg1[%c0, %c0_0, %c0_1] : memref<1x128x256xbf16, #tpu.memory_space<vmem>>, vector<1x128x256xbf16>
    %1 = vector.shape_cast %0 : vector<1x128x256xbf16> to vector<128x256xbf16>
    %c0_2 = arith.constant 0 : index
    %c0_3 = arith.constant 0 : index
    %2 = vector.load %arg2[%c0_2, %c0_3] : memref<256x384xbf16, #tpu.memory_space<vmem>>, vector<256x384xbf16>
    %c0_4 = arith.constant 0 : index
    %c0_5 = arith.constant 0 : index
    %3 = vector.load %arg3[%c0_4, %c0_5] : memref<128x384xf32, #tpu.memory_space<vmem>>, vector<128x384xf32>
    %cst = arith.constant dense<0.000000e+00> : vector<128x384xf32>
    %4 = tpu.matmul %1, %2, %cst {dimension_numbers = #tpu.dot_dimension_numbers<[1], [0], [0], [1], [0, 0, 1, 1], [], []>} : vector<128x256xbf16>, vector<256x384xbf16>, vector<128x384xf32> -> vector<128x384xf32>
    %5 = arith.addf %4, %3 : vector<128x384xf32>
    %6 = arith.truncf %5 : vector<128x384xf32> to vector<128x384xbf16>
    %7 = vector.extract_strided_slice %6 {offsets = [0, 0], sizes = [128, 128], strides = [1, 1]} : vector<128x384xbf16> to vector<128x128xbf16>
    %8 = vector.extract_strided_slice %6 {offsets = [0, 128], sizes = [128, 128], strides = [1, 1]} : vector<128x384xbf16> to vector<128x128xbf16>
    %9 = vector.extract_strided_slice %6 {offsets = [0, 256], sizes = [128, 128], strides = [1, 1]} : vector<128x384xbf16> to vector<128x128xbf16>
    %cst_6 = arith.constant dense<0.000000e+00> : vector<128x128xf32>
    %10 = tpu.matmul %7, %8, %cst_6 {dimension_numbers = #tpu.dot_dimension_numbers<[1], [1], [0], [0], [0, 0, 1, 0], [], []>} : vector<128x128xbf16>, vector<128x128xbf16>, vector<128x128xf32> -> vector<128x128xf32>
    %c0_7 = arith.constant 0 : index
    %c0_8 = arith.constant 0 : index
    %c0_9 = arith.constant 0 : index
    %11 = vector.load %arg4[%c0_7, %c0_8, %c0_9] : memref<1x128x128xf32, #tpu.memory_space<vmem>>, vector<1x128x128xf32>
    %12 = vector.shape_cast %11 : vector<1x128x128xf32> to vector<128x128xf32>
    %cst_10 = arith.constant 0.000000e+00 : f32
    %13 = vector.broadcast %cst_10 : f32 to vector<128x128xf32>
    %14 = arith.cmpf oeq, %12, %13 : vector<128x128xf32>
    %15 = arith.select %14, %10, %12 : vector<128x128xi1>, vector<128x128xf32>
    %cst_11 = arith.constant dense<0xFF800000> : vector<128xf32>
    %16 = vector.multi_reduction <maximumf>, %15, %cst_11 [1] : vector<128x128xf32> to vector<128xf32>
    %17 = vector.shape_cast %16 : vector<128xf32> to vector<128x1xf32>
    %18 = vector.broadcast %17 : vector<128x1xf32> to vector<128x128xf32>
    %19 = arith.subf %15, %18 : vector<128x128xf32>
    %20 = math.exp %19 : vector<128x128xf32>
    %cst_12 = arith.constant dense<0.000000e+00> : vector<128xf32>
    %21 = vector.multi_reduction <add>, %20, %cst_12 [1] : vector<128x128xf32> to vector<128xf32>
    %22 = vector.shape_cast %21 : vector<128xf32> to vector<128x1xf32>
    %23 = tpu.reciprocal %22 {approx = true} : vector<128x1xf32> -> vector<128x1xf32>
    %24 = vector.broadcast %23 : vector<128x1xf32> to vector<128x128xf32>
    %25 = arith.mulf %20, %24 : vector<128x128xf32>
    %26 = arith.truncf %25 : vector<128x128xf32> to vector<128x128xbf16>
    %cst_13 = arith.constant dense<0.000000e+00> : vector<128x128xf32>
    %27 = tpu.matmul %26, %9, %cst_13 {dimension_numbers = #tpu.dot_dimension_numbers<[1], [0], [0], [1], [0, 0, 1, 1], [], []>} : vector<128x128xbf16>, vector<128x128xbf16>, vector<128x128xf32> -> vector<128x128xf32>
    %28 = vector.extract_strided_slice %27 {offsets = [0, 0], sizes = [16, 128], strides = [1, 1]} : vector<128x128xf32> to vector<16x128xf32>
    %29 = vector.extract_strided_slice %27 {offsets = [16, 0], sizes = [16, 128], strides = [1, 1]} : vector<128x128xf32> to vector<16x128xf32>
    %30 = arith.addf %28, %29 : vector<16x128xf32>
    %31 = vector.extract_strided_slice %27 {offsets = [32, 0], sizes = [16, 128], strides = [1, 1]} : vector<128x128xf32> to vector<16x128xf32>
    %32 = arith.addf %30, %31 : vector<16x128xf32>
    %33 = vector.extract_strided_slice %27 {offsets = [48, 0], sizes = [16, 128], strides = [1, 1]} : vector<128x128xf32> to vector<16x128xf32>
    %34 = arith.addf %32, %33 : vector<16x128xf32>
    %35 = vector.extract_strided_slice %27 {offsets = [64, 0], sizes = [16, 128], strides = [1, 1]} : vector<128x128xf32> to vector<16x128xf32>
    %36 = arith.addf %34, %35 : vector<16x128xf32>
    %37 = vector.extract_strided_slice %27 {offsets = [80, 0], sizes = [16, 128], strides = [1, 1]} : vector<128x128xf32> to vector<16x128xf32>
    %38 = arith.addf %36, %37 : vector<16x128xf32>
    %39 = vector.extract_strided_slice %27 {offsets = [96, 0], sizes = [16, 128], strides = [1, 1]} : vector<128x128xf32> to vector<16x128xf32>
    %40 = arith.addf %38, %39 : vector<16x128xf32>
    %41 = vector.extract_strided_slice %27 {offsets = [112, 0], sizes = [16, 128], strides = [1, 1]} : vector<128x128xf32> to vector<16x128xf32>
    %42 = arith.addf %40, %41 : vector<16x128xf32>
    %c0_14 = arith.constant 0 : index
    %c0_15 = arith.constant 0 : index
    %c0_16 = arith.constant 0 : index
    %43 = vector.load %arg5[%c0_14, %c0_15, %c0_16] : memref<1x16x128xf32, #tpu.memory_space<vmem>>, vector<1x16x128xf32>
    %44 = vector.shape_cast %43 : vector<1x16x128xf32> to vector<16x128xf32>
    %45 = vector.shape_cast %42 : vector<16x128xf32> to vector<1x16x128xf32>
    tpu.vector_store %arg5[%c0_14, %c0_15, %c0_16], %45 {strides = array<i32>} : memref<1x16x128xf32, #tpu.memory_space<vmem>>, vector<1x16x128xf32>,
    return
  }
  func.func @transform_0(%arg0: i32) -> (i32, i32, i32) {
    %c0_i32 = arith.constant 0 : i32
    %c0_i32_0 = arith.constant 0 : i32
    %c0_i32_1 = arith.constant 0 : i32
    return %arg0, %c0_i32, %c0_i32_0 : i32, i32, i32
  }
  func.func @transform_1(%arg0: i32) -> (i32, i32) {
    %c0_i32 = arith.constant 0 : i32
    %c0_i32_0 = arith.constant 0 : i32
    %c0_i32_1 = arith.constant 0 : i32
    return %c0_i32, %c0_i32_0 : i32, i32
  }
  func.func @transform_2(%arg0: i32) -> (i32, i32) {
    %c0_i32 = arith.constant 0 : i32
    %c0_i32_0 = arith.constant 0 : i32
    %c0_i32_1 = arith.constant 0 : i32
    return %c0_i32, %c0_i32_0 : i32, i32
  }
  func.func @transform_3(%arg0: i32) -> (i32, i32, i32) {
    %c0_i32 = arith.constant 0 : i32
    %c0_i32_0 = arith.constant 0 : i32
    %c0_i32_1 = arith.constant 0 : i32
    return %arg0, %c0_i32, %c0_i32_0 : i32, i32, i32
  }
  func.func @transform_4(%arg0: i32) -> (i32, i32, i32) {
    %c0_i32 = arith.constant 0 : i32
    %c0_i32_0 = arith.constant 0 : i32
    %c0_i32_1 = arith.constant 0 : i32
    return %arg0, %c0_i32, %c0_i32_0 : i32, i32, i32
  }
}

</mosaic_0001>

<llo_original>
// kernel: tpu_custom_call.1
$region0: #{tpu_custom_call.1}
  #allocation0 [shape = 'u32[]', space=smem, size = 0x4, offset = 0x4, fixed_abs, tag = 'smem constant byte address 0x4 - core index']
  #allocation1 [shape = 'u32[144,128]{1,0:T(1,128)}', space=vmem, size = 0x12000, scoped, tag = 'internal scratch']
  %s0 = inlined_call_operand.hbm [shape: bf16[2,128,256], index: 0, kind: input, shape index: {}]
  %s1 = inlined_call_operand.hbm [shape: bf16[256,384], index: 1, kind: input, shape index: {}]
  %s2 = inlined_call_operand.hbm [shape: f32[128,384], index: 2, kind: input, shape index: {}]
  %s3 = inlined_call_operand.hbm [shape: f32[2,128,128], index: 3, kind: input, shape index: {}]
  %s4 = inlined_call_operand.hbm [shape: f32[2,16,128], index: 4, kind: output, shape index: {}]
  %s5 = sld [smem:[#allocation0]]
  $region65: #{tpu_custom_call.1} parent=0
    _
  %s7 = ssub.s32 1, %s5
  %s8 = scalar_select 0, %s7, %s5
  $region1: #{tpu_custom_call.1} parent=0
    #allocation2 [shape = 'u8[131072]{0}', space=vmem, size = 0x20000, scoped, tag = 'input window, operand 0']
    #allocation3 [shape = 's32[2]{0}', space=sflag, size = 0x8, scoped, tag = 'scoped memory for tpu_custom_call.1']
    #allocation4 [shape = 's32[2]{0}', space=sflag, size = 0x8, scoped, tag = 'scoped memory for tpu_custom_call.1']
    #allocation5 [shape = 'u8[196608]{0}', space=vmem, size = 0x30000, scoped, tag = 'input window, operand 1, single buffered']
    #allocation6 [shape = 's32[1]{0}', space=sflag, size = 0x4, scoped, tag = 'scoped memory for tpu_custom_call.1']
    #allocation7 [shape = 'u8[196608]{0}', space=vmem, size = 0x30000, scoped, tag = 'input window, operand 2, single buffered']
    #allocation8 [shape = 'u8[131072]{0}', space=vmem, size = 0x20000, scoped, tag = 'input window, operand 3']
    #allocation9 [shape = 's32[2]{0}', space=sflag, size = 0x8, scoped, tag = 'scoped memory for tpu_custom_call.1']
    #allocation10 [shape = 'u8[16384]{0}', space=vmem, size = 0x4000, scoped, tag = 'output window, operand 0']
    %9 = vsyncpa [#allocation3], 0
    %s10 = scalar_lea.sflag [#allocation3], 1
    %11 = vsyncpa %s10, 0
    %12 = vsyncpa [#allocation6], 0
    %13 = vsyncpa [#allocation9], 0
    %s14 = scalar_lea.sflag [#allocation9], 1
    %15 = vsyncpa %s14, 0
    %16 = vsyncpa [#allocation4], 0
    %s17 = scalar_lea.sflag [#allocation4], 1
    %18 = vsyncpa %s17, 0
    loop: start=0, step=1, limit=4
    $region2: #{tpu_custom_call.1} parent=1 // loop_pre_header
      _
    $region3: #{tpu_custom_call.1} parent=1 // loop_header
      %s20 = sphi 0, %s24
      %p21 = scmp.ge.s32.totalorder %s20, 4
      %s30 = sphi 0, %s32
      %s33 = sphi 0, %s30
      %s34 = sphi 0, %s33
      %s50 = sphi 0, %s34
      %s54 = sphi 0, %s54
      %s56 = sphi 0, %s54
      %s57 = sphi 0, %s56
      %s71 = sphi 0, %s57
      %s75 = sphi 0, %s75
      %s77 = sphi 0, %s75
      %s78 = sphi 0, %s77
      %s92 = sphi 0, %s78
      %s98 = sphi 0, %s100
      %s101 = sphi 0, %s98
      %s102 = sphi 0, %s101
      %s118 = sphi 0, %s102
      %s124 = sphi 0, %s126
      %s127 = sphi 0, %s124
      %s128 = sphi 0, %s127
      %s144 = sphi 0, %s128
    $region4: #{tpu_custom_call.1} parent=1 // loop_header_branch
      %23 = sbr.rel (%p21) target = $region8
    $region5: #{tpu_custom_call.1} parent=1 // loop_body
      %s25 = ssub.s32 %s20, 1
      %s26 = ssub.s32 %s20, 2
      %s27 = sadd.s32 %s20, 1
      %s28 = ssub.s32 %s20, %s27
      %p29 = scmp.eq.s32.totalorder %s28, 0
      %s31 = sadd.s32 %s30, 1
      %s32 = scalar_select %p29, %s30, %s31
      %p35 = pneg %p29
      %p36 = scmp.eq.s32.totalorder %s20, 1
      %p37 = por %p35, %p36
      %p38 = scmp.ne.s32.totalorder %s30, %s33
      %p39 = scmp.eq.s32.totalorder %s20, 0
      %p40 = por %p38, %p39
      %p41 = scmp.ne.s32.totalorder %s30, %s33
      %p42 = scmp.eq.s32.totalorder %s25, 1
      %p43 = por %p41, %p42
      %p44 = scmp.ne.s32.totalorder %s33, %s34
      %p45 = scmp.eq.s32.totalorder %s25, 0
      %p46 = por %p44, %p45
      %p47 = scmp.ne.s32.totalorder %s33, %s34
      %p48 = scmp.eq.s32.totalorder %s26, 1
      %p49 = por %p47, %p48
      %p51 = scmp.ne.s32.totalorder %s34, %s50
      %p52 = scmp.eq.s32.totalorder %s26, 0
      %p53 = por %p51, %p52
      %s55 = sadd.s32 %s54, 1
      %p58 = scmp.eq.s32.totalorder %s20, 1
      %p59 = scmp.ne.s32.totalorder %s54, %s56
      %p60 = scmp.eq.s32.totalorder %s20, 0
      %p61 = por %p59, %p60
      %p62 = scmp.ne.s32.totalorder %s54, %s56
      %p63 = scmp.eq.s32.totalorder %s25, 1
      %p64 = por %p62, %p63
      %p65 = scmp.ne.s32.totalorder %s56, %s57
      %p66 = scmp.eq.s32.totalorder %s25, 0
      %p67 = por %p65, %p66
      %p68 = scmp.ne.s32.totalorder %s56, %s57
      %p69 = scmp.eq.s32.totalorder %s26, 1
      %p70 = por %p68, %p69
      %p72 = scmp.ne.s32.totalorder %s57, %s71
      %p73 = scmp.eq.s32.totalorder %s26, 0
      %p74 = por %p72, %p73
      %s76 = sadd.s32 %s75, 1
      %p79 = scmp.eq.s32.totalorder %s20, 1
      %p80 = scmp.ne.s32.totalorder %s75, %s77
      %p81 = scmp.eq.s32.totalorder %s20, 0
      %p82 = por %p80, %p81
      %p83 = scmp.ne.s32.totalorder %s75, %s77
      %p84 = scmp.eq.s32.totalorder %s25, 1
      %p85 = por %p83, %p84
      %p86 = scmp.ne.s32.totalorder %s77, %s78
      %p87 = scmp.eq.s32.totalorder %s25, 0
      %p88 = por %p86, %p87
      %p89 = scmp.ne.s32.totalorder %s77, %s78
      %p90 = scmp.eq.s32.totalorder %s26, 1
      %p91 = por %p89, %p90
      %p93 = scmp.ne.s32.totalorder %s78, %s92
      %p94 = scmp.eq.s32.totalorder %s26, 0
      %p95 = por %p93, %p94
      %s96 = ssub.s32 %s20, %s27
      %p97 = scmp.eq.s32.totalorder %s96, 0
      %s99 = sadd.s32 %s98, 1
      %s100 = scalar_select %p97, %s98, %s99
      %p103 = pneg %p97
      %p104 = scmp.eq.s32.totalorder %s20, 1
      %p105 = por %p103, %p104
      %p106 = scmp.ne.s32.totalorder %s98, %s101
      %p107 = scmp.eq.s32.totalorder %s20, 0
      %p108 = por %p106, %p107
      %p109 = scmp.ne.s32.totalorder %s98, %s101
      %p110 = scmp.eq.s32.totalorder %s25, 1
      %p111 = por %p109, %p110
      %p112 = scmp.ne.s32.totalorder %s101, %s102
      %p113 = scmp.eq.s32.totalorder %s25, 0
      %p114 = por %p112, %p113
      %p115 = scmp.ne.s32.totalorder %s101, %s102
      %p116 = scmp.eq.s32.totalorder %s26, 1
      %p117 = por %p115, %p116
      %p119 = scmp.ne.s32.totalorder %s102, %s118
      %p120 = scmp.eq.s32.totalorder %s26, 0
      %p121 = por %p119, %p120
      %s122 = ssub.s32 %s20, %s27
      %p123 = scmp.eq.s32.totalorder %s122, 0
      %s125 = sadd.s32 %s124, 1
      %s126 = scalar_select %p123, %s124, %s125
      %p129 = pneg %p123
      %p130 = scmp.eq.s32.totalorder %s20, 1
      %p131 = por %p129, %p130
      %p132 = scmp.ne.s32.totalorder %s124, %s127
      %p133 = scmp.eq.s32.totalorder %s20, 0
      %p134 = por %p132, %p133
      %p135 = scmp.ne.s32.totalorder %s124, %s127
      %p136 = scmp.eq.s32.totalorder %s25, 1
      %p137 = por %p135, %p136
      %p138 = scmp.ne.s32.totalorder %s127, %s128
      %p139 = scmp.eq.s32.totalorder %s25, 0
      %p140 = por %p138, %p139
      %p141 = scmp.ne.s32.totalorder %s127, %s128
      %p142 = scmp.eq.s32.totalorder %s26, 1
      %p143 = por %p141, %p142
      %p145 = scmp.ne.s32.totalorder %s128, %s144
      %p146 = scmp.eq.s32.totalorder %s26, 0
      %p147 = por %p145, %p146
      %p148 = scmp.le.s32.totalorder 1, %s20
      %p149 = scmp.lt.s32.totalorder %s20, 3
      %p150 = pnand %p148, %p149
      %p151 = pneg %p150
      // Predicated region
      $region9: #{tpu_custom_call.1} parent=5 // pred_check
        _
      $region10: #{tpu_custom_call.1} parent=5 // pred_check_branch
        %153 = sbr.rel (%p150) target = $region12
      $region11: #{tpu_custom_call.1} parent=5 // pred_region
        %s154 = ssub.s32 %s20, 1
        // Predicated region
        $region13: #{tpu_custom_call.1} parent=11 // pred_check
          %p155 = pneg %p67
        $region14: #{tpu_custom_call.1} parent=11 // pred_check_branch
          %157 = sbr.rel (%p155) target = $region16
        $region15: #{tpu_custom_call.1} parent=11 // pred_region
          %s159 = ssub.s32 6144, 6144
          %160 = vsyncadd [#allocation6], %s159
          %s161 = sshll.u32 [#allocation5], 4
          %s162 = int_to_ptr.vmem [resolvable:$true] %s161
          %167 = dma.hbm_to_vmem [thread:$0]  %s1, 6144, %s162, [#allocation6], 192, 192, 12
        $region16: #{tpu_custom_call.1} parent=11 // pred_fallthru
          _
        // Predicated region
        $region17: #{tpu_custom_call.1} parent=11 // pred_check
          %p168 = pneg %p88
        $region18: #{tpu_custom_call.1} parent=11 // pred_check_branch
          %170 = sbr.rel (%p168) target = $region20
        $region19: #{tpu_custom_call.1} parent=11 // pred_region
          %s172 = ssub.s32 6144, 6144
          %173 = vsyncadd [#allocation6], %s172
          %s174 = sshll.u32 [#allocation7], 4
          %s175 = int_to_ptr.vmem [resolvable:$true] %s174
          %180 = dma.hbm_to_vmem [thread:$0]  %s2, 6144, %s175, [#allocation6], 384, 384, 24
        $region20: #{tpu_custom_call.1} parent=11 // pred_fallthru
          _
      $region12: #{tpu_custom_call.1} parent=5 // pred_fallthru
        _
      %p181 = scmp.lt.s32.totalorder %s20, 2
      // Predicated region
      $region21: #{tpu_custom_call.1} parent=5 // pred_check
        %p182 = pneg %p181
      $region22: #{tpu_custom_call.1} parent=5 // pred_check_branch
        %184 = sbr.rel (%p182) target = $region24
      $region23: #{tpu_custom_call.1} parent=5 // pred_region
        // Predicated region
        $region25: #{tpu_custom_call.1} parent=23 // pred_check
          %p185 = pneg %p40
        $region26: #{tpu_custom_call.1} parent=23 // pred_check_branch
          %187 = sbr.rel (%p185) target = $region28
        $region27: #{tpu_custom_call.1} parent=23 // pred_region
          %s188 = sand.u32 %s30, 1
          %s189 = scalar_lea.sflag [#allocation3], %s188
          %s190 = sand.u32 %s30, 1
          %s191 = smul.addr %s190, 128
          %s192 = scalar_lea.vmem [#allocation2], %s191
          %s194 = ssub.s32 2048, 2048
          %195 = vsyncadd %s189, %s194
          %s196 = smul.addr %s20, 32
          %s197 = smul.addr %s196, 64
          %s198 = scalar_lea.hbm %s0, %s197
          %s199 = sshll.u32 %s192, 4
          %s200 = int_to_ptr.vmem [resolvable:$true] %s199
          %205 = dma.hbm_to_vmem [thread:$0]  %s198, 2048, %s200, %s189, 128, 128, 8
        $region28: #{tpu_custom_call.1} parent=23 // pred_fallthru
          _
        // Predicated region
        $region29: #{tpu_custom_call.1} parent=23 // pred_check
          %p206 = pneg %p108
        $region30: #{tpu_custom_call.1} parent=23 // pred_check_branch
          %208 = sbr.rel (%p206) target = $region32
        $region31: #{tpu_custom_call.1} parent=23 // pred_region
          %s209 = sand.u32 %s98, 1
          %s210 = scalar_lea.sflag [#allocation9], %s209
          %s211 = sand.u32 %s98, 1
          %s212 = smul.addr %s211, 128
          %s213 = scalar_lea.vmem [#allocation8], %s212
          %s215 = ssub.s32 2048, 2048
          %216 = vsyncadd %s210, %s215
          %s217 = smul.addr %s20, 16
          %s218 = smul.addr %s217, 128
          %s219 = scalar_lea.hbm %s3, %s218
          %s220 = sshll.u32 %s213, 4
          %s221 = int_to_ptr.vmem [resolvable:$true] %s220
          %226 = dma.hbm_to_vmem [thread:$0]  %s219, 2048, %s221, %s210, 128, 128, 8
        $region32: #{tpu_custom_call.1} parent=23 // pred_fallthru
          _
      $region24: #{tpu_custom_call.1} parent=5 // pred_fallthru
        _
      %p227 = scmp.le.s32.totalorder 1, %s20
      %p228 = scmp.lt.s32.totalorder %s20, 3
      %p229 = pnand %p227, %p228
      %p230 = pneg %p229
      // Predicated region
      $region33: #{tpu_custom_call.1} parent=5 // pred_check
        _
      $region34: #{tpu_custom_call.1} parent=5 // pred_check_branch
        %232 = sbr.rel (%p229) target = $region36
      $region35: #{tpu_custom_call.1} parent=5 // pred_region
        %s233 = ssub.s32 %s20, 1
        %s234 = sand.u32 %s33, 1
        %s235 = scalar_lea.sflag [#allocation3], %s234
        %s236 = sand.u32 %s33, 1
        %s237 = smul.addr %s236, 128
        %s238 = scalar_lea.vmem [#allocation2], %s237
        // Predicated region
        $region37: #{tpu_custom_call.1} parent=35 // pred_check
          %p239 = pneg %p46
        $region38: #{tpu_custom_call.1} parent=35 // pred_check_branch
          %241 = sbr.rel (%p239) target = $region40
        $region39: #{tpu_custom_call.1} parent=35 // pred_region
          %242 = dma.done %s235, 2048
        $region40: #{tpu_custom_call.1} parent=35 // pred_fallthru
          _
        // Predicated region
        $region41: #{tpu_custom_call.1} parent=35 // pred_check
          %p243 = pneg %p67
        $region42: #{tpu_custom_call.1} parent=35 // pred_check_branch
          %245 = sbr.rel (%p243) target = $region44
        $region43: #{tpu_custom_call.1} parent=35 // pred_region
          %246 = dma.done [#allocation6], 6144
        $region44: #{tpu_custom_call.1} parent=35 // pred_fallthru
          _
        // Predicated region
        $region45: #{tpu_custom_call.1} parent=35 // pred_check
          %p247 = pneg %p88
        $region46: #{tpu_custom_call.1} parent=35 // pred_check_branch
          %249 = sbr.rel (%p247) target = $region48
        $region47: #{tpu_custom_call.1} parent=35 // pred_region
          %250 = dma.done [#allocation6], 6144
        $region48: #{tpu_custom_call.1} parent=35 // pred_fallthru
          _
        %s251 = sand.u32 %s101, 1
        %s252 = scalar_lea.sflag [#allocation9], %s251
        %s253 = sand.u32 %s101, 1
        %s254 = smul.addr %s253, 128
        %s255 = scalar_lea.vmem [#allocation8], %s254
        // Predicated region
        $region49: #{tpu_custom_call.1} parent=35 // pred_check
          %p256 = pneg %p114
        $region50: #{tpu_custom_call.1} parent=35 // pred_check_branch
          %258 = sbr.rel (%p256) target = $region52
        $region51: #{tpu_custom_call.1} parent=35 // pred_region
          %259 = dma.done %s252, 2048
        $region52: #{tpu_custom_call.1} parent=35 // pred_fallthru
          _
        %s260 = sand.u32 %s33, 1
        %s261 = scalar_lea.sflag [#allocation3], %s260
        %s262 = sand.u32 %s33, 1
        %s263 = smul.addr %s262, 128
        %s264 = scalar_lea.vmem [#allocation2], %s263
        %p265 = pneg %p46
        %p266 = pneg %p43
        %p267 = pneg %p67
        %p268 = pneg %p64
        %p269 = pneg %p88
        %p270 = pneg %p85
        %s271 = sand.u32 %s101, 1
        %s272 = scalar_lea.sflag [#allocation9], %s271
        %s273 = sand.u32 %s101, 1
        %s274 = smul.addr %s273, 128
        %s275 = scalar_lea.vmem [#allocation8], %s274
        %p276 = pneg %p114
        %p277 = pneg %p111
        %p278 = pneg %p140
        %p279 = pneg %p137
        %s280 = sand.u32 %s127, 1
        %s281 = scalar_lea.sflag [#allocation4], %s280
        %s282 = sand.u32 %s127, 1
        %s283 = smul.addr %s282, 16
        %s284 = scalar_lea.vmem [#allocation10], %s283
        %v286 = vld [vmem:[%s238] sm:$0xff]
        %v287 = vld [vmem:[%s238 + $0x8] sm:$0xff]
        %v288 = vld [vmem:[%s238 + $0x10] sm:$0xff]
        %v289 = vld [vmem:[%s238 + $0x18] sm:$0xff]
        %v290 = vld [vmem:[%s238 + $0x20] sm:$0xff]
        %v291 = vld [vmem:[%s238 + $0x28] sm:$0xff]
        %v292 = vld [vmem:[%s238 + $0x30] sm:$0xff]
        %v293 = vld [vmem:[%s238 + $0x38] sm:$0xff]
        %v294 = vld [vmem:[%s238 + $0x40] sm:$0xff]
        %v295 = vld [vmem:[%s238 + $0x48] sm:$0xff]
        %v296 = vld [vmem:[%s238 + $0x50] sm:$0xff]
        %v297 = vld [vmem:[%s238 + $0x58] sm:$0xff]
        %v298 = vld [vmem:[%s238 + $0x60] sm:$0xff]
        %v299 = vld [vmem:[%s238 + $0x68] sm:$0xff]
        %v300 = vld [vmem:[%s238 + $0x70] sm:$0xff]
        %v301 = vld [vmem:[%s238 + $0x78] sm:$0xff]
        %v302 = vld [vmem:[#allocation5] sm:$0xff]
        %v303 = vld [vmem:[#allocation5 + $0x8] sm:$0xf]
        %v304 = vld [vmem:[#allocation5 + $0xc] sm:$0xff]
        %v305 = vld [vmem:[#allocation5 + $0x14] sm:$0xf]
        %v306 = vld [vmem:[#allocation5 + $0x18] sm:$0xff]
        %v307 = vld [vmem:[#allocation5 + $0x20] sm:$0xf]
        %v308 = vld [vmem:[#allocation5 + $0x24] sm:$0xff]
        %v309 = vld [vmem:[#allocation5 + $0x2c] sm:$0xf]
        %v310 = vld [vmem:[#allocation5 + $0x30] sm:$0xff]
        %v311 = vld [vmem:[#allocation5 + $0x38] sm:$0xf]
        %v312 = vld [vmem:[#allocation5 + $0x3c] sm:$0xff]
        %v313 = vld [vmem:[#allocation5 + $0x44] sm:$0xf]
        %v314 = vld [vmem:[#allocation5 + $0x48] sm:$0xff]
        %v315 = vld [vmem:[#allocation5 + $0x50] sm:$0xf]
        %v316 = vld [vmem:[#allocation5 + $0x54] sm:$0xff]
        %v317 = vld [vmem:[#allocation5 + $0x5c] sm:$0xf]
        %v318 = vld [vmem:[#allocation5 + $0x60] sm:$0xff]
        %v319 = vld [vmem:[#allocation5 + $0x68] sm:$0xf]
        %v320 = vld [vmem:[#allocation5 + $0x6c] sm:$0xff]
        %v321 = vld [vmem:[#allocation5 + $0x74] sm:$0xf]
        %v322 = vld [vmem:[#allocation5 + $0x78] sm:$0xff]
        %v323 = vld [vmem:[#allocation5 + $0x80] sm:$0xf]
        %v324 = vld [vmem:[#allocation5 + $0x84] sm:$0xff]
        %v325 = vld [vmem:[#allocation5 + $0x8c] sm:$0xf]
        %v326 = vld [vmem:[#allocation5 + $0x90] sm:$0xff]
        %v327 = vld [vmem:[#allocation5 + $0x98] sm:$0xf]
        %v328 = vld [vmem:[#allocation5 + $0x9c] sm:$0xff]
        %v329 = vld [vmem:[#allocation5 + $0xa4] sm:$0xf]
        %v330 = vld [vmem:[#allocation5 + $0xa8] sm:$0xff]
        %v331 = vld [vmem:[#allocation5 + $0xb0] sm:$0xf]
        %v332 = vld [vmem:[#allocation5 + $0xb4] sm:$0xff]
        %v333 = vld [vmem:[#allocation5 + $0xbc] sm:$0xf]
        %v334 = vld [vmem:[#allocation5 + $0xc0] sm:$0xff]
        %v335 = vld [vmem:[#allocation5 + $0xc8] sm:$0xf]
        %v336 = vld [vmem:[#allocation5 + $0xcc] sm:$0xff]
        %v337 = vld [vmem:[#allocation5 + $0xd4] sm:$0xf]
        %v338 = vld [vmem:[#allocation5 + $0xd8] sm:$0xff]
        %v339 = vld [vmem:[#allocation5 + $0xe0] sm:$0xf]
        %v340 = vld [vmem:[#allocation5 + $0xe4] sm:$0xff]
        %v341 = vld [vmem:[#allocation5 + $0xec] sm:$0xf]
        %v342 = vld [vmem:[#allocation5 + $0xf0] sm:$0xff]
        %v343 = vld [vmem:[#allocation5 + $0xf8] sm:$0xf]
        %v344 = vld [vmem:[#allocation5 + $0xfc] sm:$0xff]
        %v345 = vld [vmem:[#allocation5 + $0x104] sm:$0xf]
        %v346 = vld [vmem:[#allocation5 + $0x108] sm:$0xff]
        %v347 = vld [vmem:[#allocation5 + $0x110] sm:$0xf]
        %v348 = vld [vmem:[#allocation5 + $0x114] sm:$0xff]
        %v349 = vld [vmem:[#allocation5 + $0x11c] sm:$0xf]
        %v350 = vld [vmem:[#allocation5 + $0x120] sm:$0xff]
        %v351 = vld [vmem:[#allocation5 + $0x128] sm:$0xf]
        %v352 = vld [vmem:[#allocation5 + $0x12c] sm:$0xff]
        %v353 = vld [vmem:[#allocation5 + $0x134] sm:$0xf]
        %v354 = vld [vmem:[#allocation5 + $0x138] sm:$0xff]
        %v355 = vld [vmem:[#allocation5 + $0x140] sm:$0xf]
        %v356 = vld [vmem:[#allocation5 + $0x144] sm:$0xff]
        %v357 = vld [vmem:[#allocation5 + $0x14c] sm:$0xf]
        %v358 = vld [vmem:[#allocation5 + $0x150] sm:$0xff]
        %v359 = vld [vmem:[#allocation5 + $0x158] sm:$0xf]
        %v360 = vld [vmem:[#allocation5 + $0x15c] sm:$0xff]
        %v361 = vld [vmem:[#allocation5 + $0x164] sm:$0xf]
        %v362 = vld [vmem:[#allocation5 + $0x168] sm:$0xff]
        %v363 = vld [vmem:[#allocation5 + $0x170] sm:$0xf]
        %v364 = vld [vmem:[#allocation5 + $0x174] sm:$0xff]
        %v365 = vld [vmem:[#allocation5 + $0x17c] sm:$0xf]
        %v366 = vld [vmem:[#allocation7] sm:$0xff]
        %v367 = vld [vmem:[#allocation7 + $0x8] sm:$0xff]
        %v368 = vld [vmem:[#allocation7 + $0x10] sm:$0xff]
        %v369 = vld [vmem:[#allocation7 + $0x18] sm:$0xff]
        %v370 = vld [vmem:[#allocation7 + $0x20] sm:$0xff]
        %v371 = vld [vmem:[#allocation7 + $0x28] sm:$0xff]
        %v372 = vld [vmem:[#allocation7 + $0x30] sm:$0xff]
        %v373 = vld [vmem:[#allocation7 + $0x38] sm:$0xff]
        %v374 = vld [vmem:[#allocation7 + $0x40] sm:$0xff]
        %v375 = vld [vmem:[#allocation7 + $0x48] sm:$0xff]
        %v376 = vld [vmem:[#allocation7 + $0x50] sm:$0xff]
        %v377 = vld [vmem:[#allocation7 + $0x58] sm:$0xff]
        %v378 = vld [vmem:[#allocation7 + $0x60] sm:$0xff]
        %v379 = vld [vmem:[#allocation7 + $0x68] sm:$0xff]
        %v380 = vld [vmem:[#allocation7 + $0x70] sm:$0xff]
        %v381 = vld [vmem:[#allocation7 + $0x78] sm:$0xff]
        %v382 = vld [vmem:[#allocation7 + $0x80] sm:$0xff]
        %v383 = vld [vmem:[#allocation7 + $0x88] sm:$0xff]
        %v384 = vld [vmem:[#allocation7 + $0x90] sm:$0xff]
        %v385 = vld [vmem:[#allocation7 + $0x98] sm:$0xff]
        %v386 = vld [vmem:[#allocation7 + $0xa0] sm:$0xff]
        %v387 = vld [vmem:[#allocation7 + $0xa8] sm:$0xff]
        %v388 = vld [vmem:[#allocation7 + $0xb0] sm:$0xff]
        %v389 = vld [vmem:[#allocation7 + $0xb8] sm:$0xff]
        %v390 = vld [vmem:[#allocation7 + $0xc0] sm:$0xff]
        %v391 = vld [vmem:[#allocation7 + $0xc8] sm:$0xff]
        %v392 = vld [vmem:[#allocation7 + $0xd0] sm:$0xff]
        %v393 = vld [vmem:[#allocation7 + $0xd8] sm:$0xff]
        %v394 = vld [vmem:[#allocation7 + $0xe0] sm:$0xff]
        %v395 = vld [vmem:[#allocation7 + $0xe8] sm:$0xff]
        %v396 = vld [vmem:[#allocation7 + $0xf0] sm:$0xff]
        %v397 = vld [vmem:[#allocation7 + $0xf8] sm:$0xff]
        %v398 = vld [vmem:[#allocation7 + $0x100] sm:$0xff]
        %v399 = vld [vmem:[#allocation7 + $0x108] sm:$0xff]
        %v400 = vld [vmem:[#allocation7 + $0x110] sm:$0xff]
        %v401 = vld [vmem:[#allocation7 + $0x118] sm:$0xff]
        %v402 = vld [vmem:[#allocation7 + $0x120] sm:$0xff]
        %v403 = vld [vmem:[#allocation7 + $0x128] sm:$0xff]
        %v404 = vld [vmem:[#allocation7 + $0x130] sm:$0xff]
        %v405 = vld [vmem:[#allocation7 + $0x138] sm:$0xff]
        %v406 = vld [vmem:[#allocation7 + $0x140] sm:$0xff]
        %v407 = vld [vmem:[#allocation7 + $0x148] sm:$0xff]
        %v408 = vld [vmem:[#allocation7 + $0x150] sm:$0xff]
        %v409 = vld [vmem:[#allocation7 + $0x158] sm:$0xff]
        %v410 = vld [vmem:[#allocation7 + $0x160] sm:$0xff]
        %v411 = vld [vmem:[#allocation7 + $0x168] sm:$0xff]
        %v412 = vld [vmem:[#allocation7 + $0x170] sm:$0xff]
        %v413 = vld [vmem:[#allocation7 + $0x178] sm:$0xff]
        %v430 = vunpack.c.l.b16 %v286
        %v431 = vunpack.c.h.b16 %v286
        %v432 = vunpack.c.l.b16 %v287
        %v433 = vunpack.c.h.b16 %v287
        %v434 = vunpack.c.l.b16 %v288
        %v435 = vunpack.c.h.b16 %v288
        %v436 = vunpack.c.l.b16 %v289
        %v437 = vunpack.c.h.b16 %v289
        %v438 = vunpack.c.l.b16 %v290
        %v439 = vunpack.c.h.b16 %v290
        %v440 = vunpack.c.l.b16 %v291
        %v441 = vunpack.c.h.b16 %v291
        %v442 = vunpack.c.l.b16 %v292
        %v443 = vunpack.c.h.b16 %v292
        %v444 = vunpack.c.l.b16 %v293
        %v445 = vunpack.c.h.b16 %v293
        %v446 = vunpack.c.l.b16 %v294
        %v447 = vunpack.c.h.b16 %v294
        %v448 = vunpack.c.l.b16 %v295
        %v449 = vunpack.c.h.b16 %v295
        %v450 = vunpack.c.l.b16 %v296
        %v451 = vunpack.c.h.b16 %v296
        %v452 = vunpack.c.l.b16 %v297
        %v453 = vunpack.c.h.b16 %v297
        %v454 = vunpack.c.l.b16 %v298
        %v455 = vunpack.c.h.b16 %v298
        %v456 = vunpack.c.l.b16 %v299
        %v457 = vunpack.c.h.b16 %v299
        %v458 = vunpack.c.l.b16 %v300
        %v459 = vunpack.c.h.b16 %v300
        %v460 = vunpack.c.l.b16 %v301
        %v461 = vunpack.c.h.b16 %v301
        %v462 = vpack.c.b16 %v432, %v430
        %v463 = vpack.c.b16 %v433, %v431
        %v464 = vpack.c.b16 %v436, %v434
        %v465 = vpack.c.b16 %v437, %v435
        %v466 = vpack.c.b16 %v440, %v438
        %v467 = vpack.c.b16 %v441, %v439
        %v468 = vpack.c.b16 %v444, %v442
        %v469 = vpack.c.b16 %v445, %v443
        %v470 = vpack.c.b16 %v448, %v446
        %v471 = vpack.c.b16 %v449, %v447
        %v472 = vpack.c.b16 %v452, %v450
        %v473 = vpack.c.b16 %v453, %v451
        %v474 = vpack.c.b16 %v456, %v454
        %v475 = vpack.c.b16 %v457, %v455
        %v476 = vpack.c.b16 %v460, %v458
        %v477 = vpack.c.b16 %v461, %v459
        %v558 = vunpack.c.l.b16 %v302
        %v559 = vunpack.c.h.b16 %v302
        %v560 = vunpack.c.l.b16 %v303
        %v561 = vunpack.c.l.b16 %v304
        %v562 = vunpack.c.h.b16 %v304
        %v563 = vunpack.c.l.b16 %v305
        %v564 = vunpack.c.l.b16 %v306
        %v565 = vunpack.c.h.b16 %v306
        %v566 = vunpack.c.l.b16 %v307
        %v567 = vunpack.c.l.b16 %v308
        %v568 = vunpack.c.h.b16 %v308
        %v569 = vunpack.c.l.b16 %v309
        %v570 = vunpack.c.l.b16 %v310
        %v571 = vunpack.c.h.b16 %v310
        %v572 = vunpack.c.l.b16 %v311
        %v573 = vunpack.c.l.b16 %v312
        %v574 = vunpack.c.h.b16 %v312
        %v575 = vunpack.c.l.b16 %v313
        %v576 = vunpack.c.l.b16 %v314
        %v577 = vunpack.c.h.b16 %v314
        %v578 = vunpack.c.l.b16 %v315
        %v579 = vunpack.c.l.b16 %v316
        %v580 = vunpack.c.h.b16 %v316
        %v581 = vunpack.c.l.b16 %v317
        %v582 = vunpack.c.l.b16 %v318
        %v583 = vunpack.c.h.b16 %v318
        %v584 = vunpack.c.l.b16 %v319
        %v585 = vunpack.c.l.b16 %v320
        %v586 = vunpack.c.h.b16 %v320
        %v587 = vunpack.c.l.b16 %v321
        %v588 = vunpack.c.l.b16 %v322
        %v589 = vunpack.c.h.b16 %v322
        %v590 = vunpack.c.l.b16 %v323
        %v591 = vunpack.c.l.b16 %v324
        %v592 = vunpack.c.h.b16 %v324
        %v593 = vunpack.c.l.b16 %v325
        %v594 = vunpack.c.l.b16 %v326
        %v595 = vunpack.c.h.b16 %v326
        %v596 = vunpack.c.l.b16 %v327
        %v597 = vunpack.c.l.b16 %v328
        %v598 = vunpack.c.h.b16 %v328
        %v599 = vunpack.c.l.b16 %v329
        %v600 = vunpack.c.l.b16 %v330
        %v601 = vunpack.c.h.b16 %v330
        %v602 = vunpack.c.l.b16 %v331
        %v603 = vunpack.c.l.b16 %v332
        %v604 = vunpack.c.h.b16 %v332
        %v605 = vunpack.c.l.b16 %v333
        %v606 = vunpack.c.l.b16 %v334
        %v607 = vunpack.c.h.b16 %v334
        %v608 = vunpack.c.l.b16 %v335
        %v609 = vunpack.c.l.b16 %v336
        %v610 = vunpack.c.h.b16 %v336
        %v611 = vunpack.c.l.b16 %v337
        %v612 = vunpack.c.l.b16 %v338
        %v613 = vunpack.c.h.b16 %v338
        %v614 = vunpack.c.l.b16 %v339
        %v615 = vunpack.c.l.b16 %v340
        %v616 = vunpack.c.h.b16 %v340
        %v617 = vunpack.c.l.b16 %v341
        %v618 = vunpack.c.l.b16 %v342
        %v619 = vunpack.c.h.b16 %v342
        %v620 = vunpack.c.l.b16 %v343
        %v621 = vunpack.c.l.b16 %v344
        %v622 = vunpack.c.h.b16 %v344
        %v623 = vunpack.c.l.b16 %v345
        %v624 = vunpack.c.l.b16 %v346
        %v625 = vunpack.c.h.b16 %v346
        %v626 = vunpack.c.l.b16 %v347
        %v627 = vunpack.c.l.b16 %v348
        %v628 = vunpack.c.h.b16 %v348
        %v629 = vunpack.c.l.b16 %v349
        %v630 = vunpack.c.l.b16 %v350
        %v631 = vunpack.c.h.b16 %v350
        %v632 = vunpack.c.l.b16 %v351
        %v633 = vunpack.c.l.b16 %v352
        %v634 = vunpack.c.h.b16 %v352
        %v635 = vunpack.c.l.b16 %v353
        %v636 = vunpack.c.l.b16 %v354
        %v637 = vunpack.c.h.b16 %v354
        %v638 = vunpack.c.l.b16 %v355
        %v639 = vunpack.c.l.b16 %v356
        %v640 = vunpack.c.h.b16 %v356
        %v641 = vunpack.c.l.b16 %v357
        %v642 = vunpack.c.l.b16 %v358
        %v643 = vunpack.c.h.b16 %v358
        %v644 = vunpack.c.l.b16 %v359
        %v645 = vunpack.c.l.b16 %v360
        %v646 = vunpack.c.h.b16 %v360
        %v647 = vunpack.c.l.b16 %v361
        %v648 = vunpack.c.l.b16 %v362
        %v649 = vunpack.c.h.b16 %v362
        %v650 = vunpack.c.l.b16 %v363
        %v651 = vunpack.c.l.b16 %v364
        %v652 = vunpack.c.h.b16 %v364
        %v653 = vunpack.c.l.b16 %v365
        %v654 = vpack.c.b16 %v561, %v558
        %v655 = vpack.c.b16 %v562, %v559
        %v656 = vpack.c.b16 %v563, %v560
        %v657 = vpack.c.b16 %v567, %v564
        %v658 = vpack.c.b16 %v568, %v565
        %v659 = vpack.c.b16 %v569, %v566
        %v660 = vpack.c.b16 %v573, %v570
        %v661 = vpack.c.b16 %v574, %v571
        %v662 = vpack.c.b16 %v575, %v572
        %v663 = vpack.c.b16 %v579, %v576
        %v664 = vpack.c.b16 %v580, %v577
        %v665 = vpack.c.b16 %v581, %v578
        %v666 = vpack.c.b16 %v585, %v582
        %v667 = vpack.c.b16 %v586, %v583
        %v668 = vpack.c.b16 %v587, %v584
        %v669 = vpack.c.b16 %v591, %v588
        %v670 = vpack.c.b16 %v592, %v589
        %v671 = vpack.c.b16 %v593, %v590
        %v672 = vpack.c.b16 %v597, %v594
        %v673 = vpack.c.b16 %v598, %v595
        %v674 = vpack.c.b16 %v599, %v596
        %v675 = vpack.c.b16 %v603, %v600
        %v676 = vpack.c.b16 %v604, %v601
        %v677 = vpack.c.b16 %v605, %v602
        %v678 = vpack.c.b16 %v609, %v606
        %v679 = vpack.c.b16 %v610, %v607
        %v680 = vpack.c.b16 %v611, %v608
        %v681 = vpack.c.b16 %v615, %v612
        %v682 = vpack.c.b16 %v616, %v613
        %v683 = vpack.c.b16 %v617, %v614
        %v684 = vpack.c.b16 %v621, %v618
        %v685 = vpack.c.b16 %v622, %v619
        %v686 = vpack.c.b16 %v623, %v620
        %v687 = vpack.c.b16 %v627, %v624
        %v688 = vpack.c.b16 %v628, %v625
        %v689 = vpack.c.b16 %v629, %v626
        %v690 = vpack.c.b16 %v633, %v630
        %v691 = vpack.c.b16 %v634, %v631
        %v692 = vpack.c.b16 %v635, %v632
        %v693 = vpack.c.b16 %v639, %v636
        %v694 = vpack.c.b16 %v640, %v637
        %v695 = vpack.c.b16 %v641, %v638
        %v696 = vpack.c.b16 %v645, %v642
        %v697 = vpack.c.b16 %v646, %v643
        %v698 = vpack.c.b16 %v647, %v644
        %v699 = vpack.c.b16 %v651, %v648
        %v700 = vpack.c.b16 %v652, %v649
        %v701 = vpack.c.b16 %v653, %v650
        %750 = vmatprep.subr.bf16.mxu0 %v655
        %751 = vmatpush1.bf16.msra.mxu0 %v654
        %752 = vmatprep.subr.bf16.mxu0 %v658
        %753 = vmatpush1.bf16.msra.mxu0 %v657
        %754 = vmatprep.subr.bf16.mxu0 %v661
        %755 = vmatpush1.bf16.msra.mxu0 %v660
        %756 = vmatprep.subr.bf16.mxu0 %v664
        %757 = vmatpush1.bf16.msra.mxu0 %v663
        %758 = vmatprep.subr.bf16.mxu0 %v667
        %759 = vmatpush1.bf16.msra.mxu0 %v666
        %760 = vmatprep.subr.bf16.mxu0 %v670
        %761 = vmatpush1.bf16.msra.mxu0 %v669
        %762 = vmatprep.subr.bf16.mxu0 %v673
        %763 = vmatpush1.bf16.msra.mxu0 %v672
        %764 = vmatprep.subr.bf16.mxu0 %v676
        %765 = vmatpush1.bf16.msra.mxu0 %v675
        %766 = vmatprep.subr.bf16.mxu0 %v679
        %767 = vmatpush1.bf16.msra.mxu0 %v678
        %768 = vmatprep.subr.bf16.mxu0 %v682
        %769 = vmatpush1.bf16.msra.mxu0 %v681
        %770 = vmatprep.subr.bf16.mxu0 %v685
        %771 = vmatpush1.bf16.msra.mxu0 %v684
        %772 = vmatprep.subr.bf16.mxu0 %v688
        %773 = vmatpush1.bf16.msra.mxu0 %v687
        %774 = vmatprep.subr.bf16.mxu0 %v691
        %775 = vmatpush1.bf16.msra.mxu0 %v690
        %776 = vmatprep.subr.bf16.mxu0 %v694
        %777 = vmatpush1.bf16.msra.mxu0 %v693
        %778 = vmatprep.subr.bf16.mxu0 %v697
        %779 = vmatpush1.bf16.msra.mxu0 %v696
        %780 = vmatprep.subr.bf16.mxu0 %v700
        %781 = vmatpush1.bf16.msra.mxu0 %v699
        %782 = vmatprep.mubr.bf16.mxu0 %v463
        %783 = vmatmul.mubr.bf16.gmra.mrb[0].mxu0 %v462
        %v784 = vpop.f32.mrb[0].mxu0
        %v785 = vadd.f32 %v366, %v784
        %v786 = vpop.f32.mrb[0].mxu0
        %v787 = vadd.f32 %v367, %v786
        %v788 = vpop.f32.mrb[0].mxu0
        %v789 = vadd.f32 %v369, %v788
        %v790 = vpop.f32.mrb[0].mxu0
        %v791 = vadd.f32 %v370, %v790
        %792 = vmatprep.mubr.bf16.mxu0 %v465
        %793 = vmatmul.mubr.bf16.gmra.mrb[0].mxu0 %v464
        %v794 = vpop.f32.mrb[0].mxu0
        %v795 = vadd.f32 %v372, %v794
        %v796 = vpop.f32.mrb[0].mxu0
        %v797 = vadd.f32 %v373, %v796
        %v798 = vpop.f32.mrb[0].mxu0
        %v799 = vadd.f32 %v375, %v798
        %v800 = vpop.f32.mrb[0].mxu0
        %v801 = vadd.f32 %v376, %v800
        %802 = vmatprep.mubr.bf16.mxu0 %v467
        %803 = vmatmul.mubr.bf16.gmra.mrb[0].mxu0 %v466
        %v804 = vpop.f32.mrb[0].mxu0
        %v805 = vadd.f32 %v378, %v804
        %v806 = vpop.f32.mrb[0].mxu0
        %v807 = vadd.f32 %v379, %v806
        %v808 = vpop.f32.mrb[0].mxu0
        %v809 = vadd.f32 %v381, %v808
        %v810 = vpop.f32.mrb[0].mxu0
        %v811 = vadd.f32 %v382, %v810
        %812 = vmatprep.mubr.bf16.mxu0 %v469
        %813 = vmatmul.mubr.bf16.gmra.mrb[0].mxu0 %v468
        %v814 = vpop.f32.mrb[0].mxu0
        %v815 = vadd.f32 %v384, %v814
        %v816 = vpop.f32.mrb[0].mxu0
        %v817 = vadd.f32 %v385, %v816
        %v818 = vpop.f32.mrb[0].mxu0
        %v819 = vadd.f32 %v387, %v818
        %v820 = vpop.f32.mrb[0].mxu0
        %v821 = vadd.f32 %v388, %v820
        %822 = vmatprep.mubr.bf16.mxu0 %v471
        %823 = vmatmul.mubr.bf16.gmra.mrb[0].mxu0 %v470
        %v824 = vpop.f32.mrb[0].mxu0
        %v825 = vadd.f32 %v390, %v824
        %v826 = vpop.f32.mrb[0].mxu0
        %v827 = vadd.f32 %v391, %v826
        %v828 = vpop.f32.mrb[0].mxu0
        %v829 = vadd.f32 %v393, %v828
        %v830 = vpop.f32.mrb[0].mxu0
        %v831 = vadd.f32 %v394, %v830
        %832 = vmatprep.mubr.bf16.mxu0 %v473
        %833 = vmatmul.mubr.bf16.gmra.mrb[0].mxu0 %v472
        %v834 = vpop.f32.mrb[0].mxu0
        %v835 = vadd.f32 %v396, %v834
        %v836 = vpop.f32.mrb[0].mxu0
        %v837 = vadd.f32 %v397, %v836
        %v838 = vpop.f32.mrb[0].mxu0
        %v839 = vadd.f32 %v399, %v838
        %v840 = vpop.f32.mrb[0].mxu0
        %v841 = vadd.f32 %v400, %v840
        %842 = vmatprep.mubr.bf16.mxu0 %v475
        %843 = vmatmul.mubr.bf16.gmra.mrb[0].mxu0 %v474
        %v844 = vpop.f32.mrb[0].mxu0
        %v845 = vadd.f32 %v402, %v844
        %v846 = vpop.f32.mrb[0].mxu0
        %v847 = vadd.f32 %v403, %v846
        %v848 = vpop.f32.mrb[0].mxu0
        %v849 = vadd.f32 %v405, %v848
        %v850 = vpop.f32.mrb[0].mxu0
        %v851 = vadd.f32 %v406, %v850
        %852 = vmatprep.mubr.bf16.mxu0 %v477
        %853 = vmatmul.mubr.bf16.gmra.mrb[0].mxu0 %v476
        %v854 = vpop.f32.mrb[0].mxu0
        %v855 = vadd.f32 %v408, %v854
        %v856 = vpop.f32.mrb[0].mxu0
        %v857 = vadd.f32 %v409, %v856
        %v858 = vpop.f32.mrb[0].mxu0
        %v859 = vadd.f32 %v411, %v858
        %v860 = vpop.f32.mrb[0].mxu0
        %v861 = vadd.f32 %v412, %v860
        %862 = vdwg.mxu0
        %863 = vmatprep.subr.bf16.mxu0 0
        %864 = vmatpush1.bf16.msra.mxu0 %v656
        %865 = vmatprep.subr.bf16.mxu0 0
        %866 = vmatpush1.bf16.msra.mxu0 %v659
        %867 = vmatprep.subr.bf16.mxu0 0
        %868 = vmatpush1.bf16.msra.mxu0 %v662
        %869 = vmatprep.subr.bf16.mxu0 0
        %870 = vmatpush1.bf16.msra.mxu0 %v665
        %871 = vmatprep.subr.bf16.mxu0 0
        %872 = vmatpush1.bf16.msra.mxu0 %v668
        %873 = vmatprep.subr.bf16.mxu0 0
        %874 = vmatpush1.bf16.msra.mxu0 %v671
        %875 = vmatprep.subr.bf16.mxu0 0
        %876 = vmatpush1.bf16.msra.mxu0 %v674
        %877 = vmatprep.subr.bf16.mxu0 0
        %878 = vmatpush1.bf16.msra.mxu0 %v677
        %879 = vmatprep.subr.bf16.mxu0 0
        %880 = vmatpush1.bf16.msra.mxu0 %v680
        %881 = vmatprep.subr.bf16.mxu0 0
        %882 = vmatpush1.bf16.msra.mxu0 %v683
        %883 = vmatprep.subr.bf16.mxu0 0
        %884 = vmatpush1.bf16.msra.mxu0 %v686
        %885 = vmatprep.subr.bf16.mxu0 0
        %886 = vmatpush1.bf16.msra.mxu0 %v689
        %887 = vmatprep.subr.bf16.mxu0 0
        %888 = vmatpush1.bf16.msra.mxu0 %v692
        %889 = vmatprep.subr.bf16.mxu0 0
        %890 = vmatpush1.bf16.msra.mxu0 %v695
        %891 = vmatprep.subr.bf16.mxu0 0
        %892 = vmatpush1.bf16.msra.mxu0 %v698
        %893 = vmatprep.subr.bf16.mxu0 0
        %894 = vmatpush1.bf16.msra.mxu0 %v701
        %895 = vmatprep.mubr.bf16.mxu0 %v463
        %896 = vmatmul.mubr.bf16.gmra.mrb[0].mxu0 %v462
        %v897 = vpop.f32.mrb[0].mxu0
        %v898 = vadd.f32 %v368, %v897
        %v899 = vpop.f32.mrb[0].mxu0
        %v900 = vpop.f32.mrb[0].mxu0
        %v901 = vadd.f32 %v371, %v900
        %v902 = vpop.f32.mrb[0].mxu0
        %903 = vmatprep.mubr.bf16.mxu0 %v465
        %904 = vmatmul.mubr.bf16.gmra.mrb[0].mxu0 %v464
        %v905 = vpop.f32.mrb[0].mxu0
        %v906 = vadd.f32 %v374, %v905
        %v907 = vpop.f32.mrb[0].mxu0
        %v908 = vpop.f32.mrb[0].mxu0
        %v909 = vadd.f32 %v377, %v908
        %v910 = vpop.f32.mrb[0].mxu0
        %911 = vmatprep.mubr.bf16.mxu0 %v467
        %912 = vmatmul.mubr.bf16.gmra.mrb[0].mxu0 %v466
        %v913 = vpop.f32.mrb[0].mxu0
        %v914 = vadd.f32 %v380, %v913
        %v915 = vpop.f32.mrb[0].mxu0
        %v916 = vpop.f32.mrb[0].mxu0
        %v917 = vadd.f32 %v383, %v916
        %v918 = vpop.f32.mrb[0].mxu0
        %919 = vmatprep.mubr.bf16.mxu0 %v469
        %920 = vmatmul.mubr.bf16.gmra.mrb[0].mxu0 %v468
        %v921 = vpop.f32.mrb[0].mxu0
        %v922 = vadd.f32 %v386, %v921
        %v923 = vpop.f32.mrb[0].mxu0
        %v924 = vpop.f32.mrb[0].mxu0
        %v925 = vadd.f32 %v389, %v924
        %v926 = vpop.f32.mrb[0].mxu0
        %927 = vmatprep.mubr.bf16.mxu0 %v471
        %928 = vmatmul.mubr.bf16.gmra.mrb[0].mxu0 %v470
        %v929 = vpop.f32.mrb[0].mxu0
        %v930 = vadd.f32 %v392, %v929
        %v931 = vpop.f32.mrb[0].mxu0
        %v932 = vpop.f32.mrb[0].mxu0
        %v933 = vadd.f32 %v395, %v932
        %v934 = vpop.f32.mrb[0].mxu0
        %935 = vmatprep.mubr.bf16.mxu0 %v473
        %936 = vmatmul.mubr.bf16.gmra.mrb[0].mxu0 %v472
        %v937 = vpop.f32.mrb[0].mxu0
        %v938 = vadd.f32 %v398, %v937
        %v939 = vpop.f32.mrb[0].mxu0
        %v940 = vpop.f32.mrb[0].mxu0
        %v941 = vadd.f32 %v401, %v940
        %v942 = vpop.f32.mrb[0].mxu0
        %943 = vmatprep.mubr.bf16.mxu0 %v475
        %944 = vmatmul.mubr.bf16.gmra.mrb[0].mxu0 %v474
        %v945 = vpop.f32.mrb[0].mxu0
        %v946 = vadd.f32 %v404, %v945
        %v947 = vpop.f32.mrb[0].mxu0
        %v948 = vpop.f32.mrb[0].mxu0
        %v949 = vadd.f32 %v407, %v948
        %v950 = vpop.f32.mrb[0].mxu0
        %951 = vmatprep.mubr.bf16.mxu0 %v477
        %952 = vmatmul.mubr.bf16.gmra.mrb[0].mxu0 %v476
        %v953 = vpop.f32.mrb[0].mxu0
        %v954 = vadd.f32 %v410, %v953
        %v955 = vpop.f32.mrb[0].mxu0
        %v956 = vpop.f32.mrb[0].mxu0
        %v957 = vadd.f32 %v413, %v956
        %v958 = vpop.f32.mrb[0].mxu0
        %959 = vdwg.mxu0
        %v960 = vpack.c.bf16 %v789, %v785
        %v961 = vpack.c.bf16 %v791, %v787
        %v962 = vpack.c.bf16 %v901, %v898
        %v963 = vpack.c.bf16 %v799, %v795
        %v964 = vpack.c.bf16 %v801, %v797
        %v965 = vpack.c.bf16 %v909, %v906
        %v966 = vpack.c.bf16 %v809, %v805
        %v967 = vpack.c.bf16 %v811, %v807
        %v968 = vpack.c.bf16 %v917, %v914
        %v969 = vpack.c.bf16 %v819, %v815
        %v970 = vpack.c.bf16 %v821, %v817
        %v971 = vpack.c.bf16 %v925, %v922
        %v972 = vpack.c.bf16 %v829, %v825
        %v973 = vpack.c.bf16 %v831, %v827
        %v974 = vpack.c.bf16 %v933, %v930
        %v975 = vpack.c.bf16 %v839, %v835
        %v976 = vpack.c.bf16 %v841, %v837
        %v977 = vpack.c.bf16 %v941, %v938
        %v978 = vpack.c.bf16 %v849, %v845
        %v979 = vpack.c.bf16 %v851, %v847
        %v980 = vpack.c.bf16 %v949, %v946
        %v981 = vpack.c.bf16 %v859, %v855
        %v982 = vpack.c.bf16 %v861, %v857
        %v983 = vpack.c.bf16 %v957, %v954
        %984 = vmatprep.subr.bf16.mxu0 0
        %985 = vmatpush1.bf16.xpose.msra.mxu0 %v961
        %986 = vmatprep.subr.bf16.mxu0 0
        %987 = vmatpush1.bf16.xpose.msra.mxu0 %v964
        %988 = vmatprep.subr.bf16.mxu0 0
        %989 = vmatpush1.bf16.xpose.msra.mxu0 %v967
        %990 = vmatprep.subr.bf16.mxu0 0
        %991 = vmatpush1.bf16.xpose.msra.mxu0 %v970
        %992 = vmatprep.subr.bf16.mxu0 0
        %993 = vmatpush1.bf16.xpose.msra.mxu0 %v973
        %994 = vmatprep.subr.bf16.mxu0 0
        %995 = vmatpush1.bf16.xpose.msra.mxu0 %v976
        %996 = vmatprep.subr.bf16.mxu0 0
        %997 = vmatpush1.bf16.xpose.msra.mxu0 %v979
        %998 = vmatprep.subr.bf16.mxu0 0
        %999 = vmatpush1.bf16.xpose.msra.mxu0 %v982
        %1000 = vmatprep.subr.bf16.mxu0 0
        %1001 = vmatpush1.bf16.xpose.msra.mxu0 0
        %1002 = vmatprep.subr.bf16.mxu0 0
        %1003 = vmatpush1.bf16.xpose.msra.mxu0 0
        %1004 = vmatprep.subr.bf16.mxu0 0
        %1005 = vmatpush1.bf16.xpose.msra.mxu0 0
        %1006 = vmatprep.subr.bf16.mxu0 0
        %1007 = vmatpush1.bf16.xpose.msra.mxu0 0
        %1008 = vmatprep.subr.bf16.mxu0 0
        %1009 = vmatpush1.bf16.xpose.msra.mxu0 0
        %1010 = vmatprep.subr.bf16.mxu0 0
        %1011 = vmatpush1.bf16.xpose.msra.mxu0 0
        %1012 = vmatprep.subr.bf16.mxu0 0
        %1013 = vmatpush1.bf16.xpose.msra.mxu0 0
        %1014 = vmatprep.subr.bf16.mxu0 0
        %1015 = vmatpush1.bf16.xpose.msra.mxu0 0
        %1016 = vmatprep.mubr.bf16.mxu0 0
        %1017 = vmatmul.mubr.bf16.gmra.mrb[0].mxu0 %v960
        %v1018 = vpop.f32.mrb[0].mxu0
        %v1019 = vadd.f32 0.0, %v1018
        %v1020 = vpop.f32.mrb[0].mxu0
        %v1021 = vpop.f32.mrb[0].mxu0
        %v1022 = vadd.f32 0.0, %v1021
        %v1023 = vpop.f32.mrb[0].mxu0
        %1024 = vmatprep.mubr.bf16.mxu0 0
        %1025 = vmatmul.mubr.bf16.gmra.mrb[0].mxu0 %v963
        %v1026 = vpop.f32.mrb[0].mxu0
        %v1027 = vadd.f32 0.0, %v1026
        %v1028 = vpop.f32.mrb[0].mxu0
        %v1029 = vpop.f32.mrb[0].mxu0
        %v1030 = vadd.f32 0.0, %v1029
        %v1031 = vpop.f32.mrb[0].mxu0
        %1032 = vmatprep.mubr.bf16.mxu0 0
        %1033 = vmatmul.mubr.bf16.gmra.mrb[0].mxu0 %v966
        %v1034 = vpop.f32.mrb[0].mxu0
        %v1035 = vadd.f32 0.0, %v1034
        %v1036 = vpop.f32.mrb[0].mxu0
        %v1037 = vpop.f32.mrb[0].mxu0
        %v1038 = vadd.f32 0.0, %v1037
        %v1039 = vpop.f32.mrb[0].mxu0
        %1040 = vmatprep.mubr.bf16.mxu0 0
        %1041 = vmatmul.mubr.bf16.gmra.mrb[0].mxu0 %v969
        %v1042 = vpop.f32.mrb[0].mxu0
        %v1043 = vadd.f32 0.0, %v1042
        %v1044 = vpop.f32.mrb[0].mxu0
        %v1045 = vpop.f32.mrb[0].mxu0
        %v1046 = vadd.f32 0.0, %v1045
        %v1047 = vpop.f32.mrb[0].mxu0
        %1048 = vmatprep.mubr.bf16.mxu0 0
        %1049 = vmatmul.mubr.bf16.gmra.mrb[0].mxu0 %v972
        %v1050 = vpop.f32.mrb[0].mxu0
        %v1051 = vadd.f32 0.0, %v1050
        %v1052 = vpop.f32.mrb[0].mxu0
        %v1053 = vpop.f32.mrb[0].mxu0
        %v1054 = vadd.f32 0.0, %v1053
        %v1055 = vpop.f32.mrb[0].mxu0
        %1056 = vmatprep.mubr.bf16.mxu0 0
        %1057 = vmatmul.mubr.bf16.gmra.mrb[0].mxu0 %v975
        %v1058 = vpop.f32.mrb[0].mxu0
        %v1059 = vadd.f32 0.0, %v1058
        %v1060 = vpop.f32.mrb[0].mxu0
        %v1061 = vpop.f32.mrb[0].mxu0
        %v1062 = vadd.f32 0.0, %v1061
        %v1063 = vpop.f32.mrb[0].mxu0
        %1064 = vmatprep.mubr.bf16.mxu0 0
        %1065 = vmatmul.mubr.bf16.gmra.mrb[0].mxu0 %v978
        %v1066 = vpop.f32.mrb[0].mxu0
        %v1067 = vadd.f32 0.0, %v1066
        %v1068 = vpop.f32.mrb[0].mxu0
        %v1069 = vpop.f32.mrb[0].mxu0
        %v1070 = vadd.f32 0.0, %v1069
        %v1071 = vpop.f32.mrb[0].mxu0
        %1072 = vmatprep.mubr.bf16.mxu0 0
        %1073 = vmatmul.mubr.bf16.gmra.mrb[0].mxu0 %v981
        %v1074 = vpop.f32.mrb[0].mxu0
        %v1075 = vadd.f32 0.0, %v1074
        %v1076 = vpop.f32.mrb[0].mxu0
        %v1077 = vpop.f32.mrb[0].mxu0
        %v1078 = vadd.f32 0.0, %v1077
        %v1079 = vpop.f32.mrb[0].mxu0
        %1080 = vdwg.mxu0
        %v1081 = vld [vmem:[%s255] sm:$0xff]
        %v1082 = vld [vmem:[%s255 + $0x8] sm:$0xff]
        %v1083 = vld [vmem:[%s255 + $0x10] sm:$0xff]
        %v1084 = vld [vmem:[%s255 + $0x18] sm:$0xff]
        %v1085 = vld [vmem:[%s255 + $0x20] sm:$0xff]
        %v1086 = vld [vmem:[%s255 + $0x28] sm:$0xff]
        %v1087 = vld [vmem:[%s255 + $0x30] sm:$0xff]
        %v1088 = vld [vmem:[%s255 + $0x38] sm:$0xff]
        %v1089 = vld [vmem:[%s255 + $0x40] sm:$0xff]
        %v1090 = vld [vmem:[%s255 + $0x48] sm:$0xff]
        %v1091 = vld [vmem:[%s255 + $0x50] sm:$0xff]
        %v1092 = vld [vmem:[%s255 + $0x58] sm:$0xff]
        %v1093 = vld [vmem:[%s255 + $0x60] sm:$0xff]
        %v1094 = vld [vmem:[%s255 + $0x68] sm:$0xff]
        %v1095 = vld [vmem:[%s255 + $0x70] sm:$0xff]
        %v1096 = vld [vmem:[%s255 + $0x78] sm:$0xff]
        %vm1097 = vcmp.eq.f32.partialorder %v1081, 0.0
        %vm1098 = vcmp.eq.f32.partialorder %v1082, 0.0
        %vm1099 = vcmp.eq.f32.partialorder %v1083, 0.0
        %vm1100 = vcmp.eq.f32.partialorder %v1084, 0.0
        %vm1101 = vcmp.eq.f32.partialorder %v1085, 0.0
        %vm1102 = vcmp.eq.f32.partialorder %v1086, 0.0
        %vm1103 = vcmp.eq.f32.partialorder %v1087, 0.0
        %vm1104 = vcmp.eq.f32.partialorder %v1088, 0.0
        %vm1105 = vcmp.eq.f32.partialorder %v1089, 0.0
        %vm1106 = vcmp.eq.f32.partialorder %v1090, 0.0
        %vm1107 = vcmp.eq.f32.partialorder %v1091, 0.0
        %vm1108 = vcmp.eq.f32.partialorder %v1092, 0.0
        %vm1109 = vcmp.eq.f32.partialorder %v1093, 0.0
        %vm1110 = vcmp.eq.f32.partialorder %v1094, 0.0
        %vm1111 = vcmp.eq.f32.partialorder %v1095, 0.0
        %vm1112 = vcmp.eq.f32.partialorder %v1096, 0.0
        %v1113 = vsel %vm1097, %v1019, %v1081
        %v1114 = vsel %vm1098, %v1022, %v1082
        %v1115 = vsel %vm1099, %v1027, %v1083
        %v1116 = vsel %vm1100, %v1030, %v1084
        %v1117 = vsel %vm1101, %v1035, %v1085
        %v1118 = vsel %vm1102, %v1038, %v1086
        %v1119 = vsel %vm1103, %v1043, %v1087
        %v1120 = vsel %vm1104, %v1046, %v1088
        %v1121 = vsel %vm1105, %v1051, %v1089
        %v1122 = vsel %vm1106, %v1054, %v1090
        %v1123 = vsel %vm1107, %v1059, %v1091
        %v1124 = vsel %vm1108, %v1062, %v1092
        %v1125 = vsel %vm1109, %v1067, %v1093
        %v1126 = vsel %vm1110, %v1070, %v1094
        %v1127 = vsel %vm1111, %v1075, %v1095
        %v1128 = vsel %vm1112, %v1078, %v1096
        %1129 = vmax.xlane.f32.xlu0 %v1113
        %v1130 = vpop.xlane.xlu0 %1129
        %1131 = vmax.xlane.f32.xlu0 %v1114
        %v1132 = vpop.xlane.xlu0 %1131
        %1133 = vmax.xlane.f32.xlu0 %v1115
        %v1134 = vpop.xlane.xlu0 %1133
        %1135 = vmax.xlane.f32.xlu0 %v1116
        %v1136 = vpop.xlane.xlu0 %1135
        %1137 = vmax.xlane.f32.xlu0 %v1117
        %v1138 = vpop.xlane.xlu0 %1137
        %1139 = vmax.xlane.f32.xlu0 %v1118
        %v1140 = vpop.xlane.xlu0 %1139
        %1141 = vmax.xlane.f32.xlu0 %v1119
        %v1142 = vpop.xlane.xlu0 %1141
        %1143 = vmax.xlane.f32.xlu0 %v1120
        %v1144 = vpop.xlane.xlu0 %1143
        %1145 = vmax.xlane.f32.xlu0 %v1121
        %v1146 = vpop.xlane.xlu0 %1145
        %1147 = vmax.xlane.f32.xlu0 %v1122
        %v1148 = vpop.xlane.xlu0 %1147
        %1149 = vmax.xlane.f32.xlu0 %v1123
        %v1150 = vpop.xlane.xlu0 %1149
        %1151 = vmax.xlane.f32.xlu0 %v1124
        %v1152 = vpop.xlane.xlu0 %1151
        %1153 = vmax.xlane.f32.xlu0 %v1125
        %v1154 = vpop.xlane.xlu0 %1153
        %1155 = vmax.xlane.f32.xlu0 %v1126
        %v1156 = vpop.xlane.xlu0 %1155
        %1157 = vmax.xlane.f32.xlu0 %v1127
        %v1158 = vpop.xlane.xlu0 %1157
        %1159 = vmax.xlane.f32.xlu0 %v1128
        %v1160 = vpop.xlane.xlu0 %1159
        %v1161 = vsub.f32 %v1113, %v1130
        %v1162 = vsub.f32 %v1114, %v1132
        %v1163 = vsub.f32 %v1115, %v1134
        %v1164 = vsub.f32 %v1116, %v1136
        %v1165 = vsub.f32 %v1117, %v1138
        %v1166 = vsub.f32 %v1118, %v1140
        %v1167 = vsub.f32 %v1119, %v1142
        %v1168 = vsub.f32 %v1120, %v1144
        %v1169 = vsub.f32 %v1121, %v1146
        %v1170 = vsub.f32 %v1122, %v1148
        %v1171 = vsub.f32 %v1123, %v1150
        %v1172 = vsub.f32 %v1124, %v1152
        %v1173 = vsub.f32 %v1125, %v1154
        %v1174 = vsub.f32 %v1126, %v1156
        %v1175 = vsub.f32 %v1127, %v1158
        %v1176 = vsub.f32 %v1128, %v1160
        %v1177 = vmul.f32 %v1161, 1.442695
        %v1178 = vpow.pop %v1177
        %v1179 = vmul.f32 %v1162, 1.442695
        %v1180 = vpow.pop %v1179
        %v1181 = vmul.f32 %v1163, 1.442695
        %v1182 = vpow.pop %v1181
        %v1183 = vmul.f32 %v1164, 1.442695
        %v1184 = vpow.pop %v1183
        %v1185 = vmul.f32 %v1165, 1.442695
        %v1186 = vpow.pop %v1185
        %v1187 = vmul.f32 %v1166, 1.442695
        %v1188 = vpow.pop %v1187
        %v1189 = vmul.f32 %v1167, 1.442695
        %v1190 = vpow.pop %v1189
        %v1191 = vmul.f32 %v1168, 1.442695
        %v1192 = vpow.pop %v1191
        %v1193 = vmul.f32 %v1169, 1.442695
        %v1194 = vpow.pop %v1193
        %v1195 = vmul.f32 %v1170, 1.442695
        %v1196 = vpow.pop %v1195
        %v1197 = vmul.f32 %v1171, 1.442695
        %v1198 = vpow.pop %v1197
        %v1199 = vmul.f32 %v1172, 1.442695
        %v1200 = vpow.pop %v1199
        %v1201 = vmul.f32 %v1173, 1.442695
        %v1202 = vpow.pop %v1201
        %v1203 = vmul.f32 %v1174, 1.442695
        %v1204 = vpow.pop %v1203
        %v1205 = vmul.f32 %v1175, 1.442695
        %v1206 = vpow.pop %v1205
        %v1207 = vmul.f32 %v1176, 1.442695
        %v1208 = vpow.pop %v1207
        %1209 = vadd.xlane.f32.xlu0 %v1178
        %v1210 = vpop.xlane.xlu0 %1209
        %1211 = vadd.xlane.f32.xlu0 %v1180
        %v1212 = vpop.xlane.xlu0 %1211
        %1213 = vadd.xlane.f32.xlu0 %v1182
        %v1214 = vpop.xlane.xlu0 %1213
        %1215 = vadd.xlane.f32.xlu0 %v1184
        %v1216 = vpop.xlane.xlu0 %1215
        %1217 = vadd.xlane.f32.xlu0 %v1186
        %v1218 = vpop.xlane.xlu0 %1217
        %1219 = vadd.xlane.f32.xlu0 %v1188
        %v1220 = vpop.xlane.xlu0 %1219
        %1221 = vadd.xlane.f32.xlu0 %v1190
        %v1222 = vpop.xlane.xlu0 %1221
        %1223 = vadd.xlane.f32.xlu0 %v1192
        %v1224 = vpop.xlane.xlu0 %1223
        %1225 = vadd.xlane.f32.xlu0 %v1194
        %v1226 = vpop.xlane.xlu0 %1225
        %1227 = vadd.xlane.f32.xlu0 %v1196
        %v1228 = vpop.xlane.xlu0 %1227
        %1229 = vadd.xlane.f32.xlu0 %v1198
        %v1230 = vpop.xlane.xlu0 %1229
        %1231 = vadd.xlane.f32.xlu0 %v1200
        %v1232 = vpop.xlane.xlu0 %1231
        %1233 = vadd.xlane.f32.xlu0 %v1202
        %v1234 = vpop.xlane.xlu0 %1233
        %1235 = vadd.xlane.f32.xlu0 %v1204
        %v1236 = vpop.xlane.xlu0 %1235
        %1237 = vadd.xlane.f32.xlu0 %v1206
        %v1238 = vpop.xlane.xlu0 %1237
        %1239 = vadd.xlane.f32.xlu0 %v1208
        %v1240 = vpop.xlane.xlu0 %1239
        %v1241 = vrcp.pop %v1210
        %v1242 = vrcp.pop %v1212
        %v1243 = vrcp.pop %v1214
        %v1244 = vrcp.pop %v1216
        %v1245 = vrcp.pop %v1218
        %v1246 = vrcp.pop %v1220
        %v1247 = vrcp.pop %v1222
        %v1248 = vrcp.pop %v1224
        %v1249 = vrcp.pop %v1226
        %v1250 = vrcp.pop %v1228
        %v1251 = vrcp.pop %v1230
        %v1252 = vrcp.pop %v1232
        %v1253 = vrcp.pop %v1234
        %v1254 = vrcp.pop %v1236
        %v1255 = vrcp.pop %v1238
        %v1256 = vrcp.pop %v1240
        %v1257 = vmul.f32 %v1178, %v1241
        %v1258 = vmul.f32 %v1180, %v1242
        %v1259 = vmul.f32 %v1182, %v1243
        %v1260 = vmul.f32 %v1184, %v1244
        %v1261 = vmul.f32 %v1186, %v1245
        %v1262 = vmul.f32 %v1188, %v1246
        %v1263 = vmul.f32 %v1190, %v1247
        %v1264 = vmul.f32 %v1192, %v1248
        %v1265 = vmul.f32 %v1194, %v1249
        %v1266 = vmul.f32 %v1196, %v1250
        %v1267 = vmul.f32 %v1198, %v1251
        %v1268 = vmul.f32 %v1200, %v1252
        %v1269 = vmul.f32 %v1202, %v1253
        %v1270 = vmul.f32 %v1204, %v1254
        %v1271 = vmul.f32 %v1206, %v1255
        %v1272 = vmul.f32 %v1208, %v1256
        %v1273 = vpack.c.bf16 %v1258, %v1257
        %v1274 = vpack.c.bf16 %v1260, %v1259
        %v1275 = vpack.c.bf16 %v1262, %v1261
        %v1276 = vpack.c.bf16 %v1264, %v1263
        %v1277 = vpack.c.bf16 %v1266, %v1265
        %v1278 = vpack.c.bf16 %v1268, %v1267
        %v1279 = vpack.c.bf16 %v1270, %v1269
        %v1280 = vpack.c.bf16 %v1272, %v1271
        %1281 = vmatprep.subr.bf16.mxu0 0
        %1282 = vmatpush1.bf16.msra.mxu0 %v962
        %1283 = vmatprep.subr.bf16.mxu0 0
        %1284 = vmatpush1.bf16.msra.mxu0 %v965
        %1285 = vmatprep.subr.bf16.mxu0 0
        %1286 = vmatpush1.bf16.msra.mxu0 %v968
        %1287 = vmatprep.subr.bf16.mxu0 0
        %1288 = vmatpush1.bf16.msra.mxu0 %v971
        %1289 = vmatprep.subr.bf16.mxu0 0
        %1290 = vmatpush1.bf16.msra.mxu0 %v974
        %1291 = vmatprep.subr.bf16.mxu0 0
        %1292 = vmatpush1.bf16.msra.mxu0 %v977
        %1293 = vmatprep.subr.bf16.mxu0 0
        %1294 = vmatpush1.bf16.msra.mxu0 %v980
        %1295 = vmatprep.subr.bf16.mxu0 0
        %1296 = vmatpush1.bf16.msra.mxu0 %v983
        %1297 = vmatprep.subr.bf16.mxu0 0
        %1298 = vmatpush1.bf16.msra.mxu0 0
        %1299 = vmatprep.subr.bf16.mxu0 0
        %1300 = vmatpush1.bf16.msra.mxu0 0
        %1301 = vmatprep.subr.bf16.mxu0 0
        %1302 = vmatpush1.bf16.msra.mxu0 0
        %1303 = vmatprep.subr.bf16.mxu0 0
        %1304 = vmatpush1.bf16.msra.mxu0 0
        %1305 = vmatprep.subr.bf16.mxu0 0
        %1306 = vmatpush1.bf16.msra.mxu0 0
        %1307 = vmatprep.subr.bf16.mxu0 0
        %1308 = vmatpush1.bf16.msra.mxu0 0
        %1309 = vmatprep.subr.bf16.mxu0 0
        %1310 = vmatpush1.bf16.msra.mxu0 0
        %1311 = vmatprep.subr.bf16.mxu0 0
        %1312 = vmatpush1.bf16.msra.mxu0 0
        %1313 = vmatprep.mubr.bf16.mxu0 0
        %1314 = vmatmul.mubr.bf16.gmra.mrb[0].mxu0 %v1273
        %v1315 = vpop.f32.mrb[0].mxu0
        %v1316 = vadd.f32 0.0, %v1315
        %v1317 = vpop.f32.mrb[0].mxu0
        %v1318 = vpop.f32.mrb[0].mxu0
        %v1319 = vadd.f32 0.0, %v1318
        %v1320 = vpop.f32.mrb[0].mxu0
        %1321 = vmatprep.mubr.bf16.mxu0 0
        %1322 = vmatmul.mubr.bf16.gmra.mrb[0].mxu0 %v1274
        %v1323 = vpop.f32.mrb[0].mxu0
        %v1324 = vadd.f32 0.0, %v1323
        %v1325 = vpop.f32.mrb[0].mxu0
        %v1326 = vpop.f32.mrb[0].mxu0
        %v1327 = vadd.f32 0.0, %v1326
        %v1328 = vpop.f32.mrb[0].mxu0
        %1329 = vmatprep.mubr.bf16.mxu0 0
        %1330 = vmatmul.mubr.bf16.gmra.mrb[0].mxu0 %v1275
        %v1331 = vpop.f32.mrb[0].mxu0
        %v1332 = vadd.f32 0.0, %v1331
        %v1333 = vpop.f32.mrb[0].mxu0
        %v1334 = vpop.f32.mrb[0].mxu0
        %v1335 = vadd.f32 0.0, %v1334
        %v1336 = vpop.f32.mrb[0].mxu0
        %1337 = vmatprep.mubr.bf16.mxu0 0
        %1338 = vmatmul.mubr.bf16.gmra.mrb[0].mxu0 %v1276
        %v1339 = vpop.f32.mrb[0].mxu0
        %v1340 = vadd.f32 0.0, %v1339
        %v1341 = vpop.f32.mrb[0].mxu0
        %v1342 = vpop.f32.mrb[0].mxu0
        %v1343 = vadd.f32 0.0, %v1342
        %v1344 = vpop.f32.mrb[0].mxu0
        %1345 = vmatprep.mubr.bf16.mxu0 0
        %1346 = vmatmul.mubr.bf16.gmra.mrb[0].mxu0 %v1277
        %v1347 = vpop.f32.mrb[0].mxu0
        %v1348 = vadd.f32 0.0, %v1347
        %v1349 = vpop.f32.mrb[0].mxu0
        %v1350 = vpop.f32.mrb[0].mxu0
        %v1351 = vadd.f32 0.0, %v1350
        %v1352 = vpop.f32.mrb[0].mxu0
        %1353 = vmatprep.mubr.bf16.mxu0 0
        %1354 = vmatmul.mubr.bf16.gmra.mrb[0].mxu0 %v1278
        %v1355 = vpop.f32.mrb[0].mxu0
        %v1356 = vadd.f32 0.0, %v1355
        %v1357 = vpop.f32.mrb[0].mxu0
        %v1358 = vpop.f32.mrb[0].mxu0
        %v1359 = vadd.f32 0.0, %v1358
        %v1360 = vpop.f32.mrb[0].mxu0
        %1361 = vmatprep.mubr.bf16.mxu0 0
        %1362 = vmatmul.mubr.bf16.gmra.mrb[0].mxu0 %v1279
        %v1363 = vpop.f32.mrb[0].mxu0
        %v1364 = vadd.f32 0.0, %v1363
        %v1365 = vpop.f32.mrb[0].mxu0
        %v1366 = vpop.f32.mrb[0].mxu0
        %v1367 = vadd.f32 0.0, %v1366
        %v1368 = vpop.f32.mrb[0].mxu0
        %1369 = vmatprep.mubr.bf16.mxu0 0
        %1370 = vmatmul.mubr.bf16.gmra.mrb[0].mxu0 %v1280
        %v1371 = vpop.f32.mrb[0].mxu0
        %v1372 = vadd.f32 0.0, %v1371
        %v1373 = vpop.f32.mrb[0].mxu0
        %v1374 = vpop.f32.mrb[0].mxu0
        %v1375 = vadd.f32 0.0, %v1374
        %v1376 = vpop.f32.mrb[0].mxu0
        %1377 = vdwg.mxu0
        %v1378 = vadd.f32 %v1316, %v1324
        %v1379 = vadd.f32 %v1319, %v1327
        %v1380 = vadd.f32 %v1378, %v1332
        %v1381 = vadd.f32 %v1379, %v1335
        %v1382 = vadd.f32 %v1380, %v1340
        %v1383 = vadd.f32 %v1381, %v1343
        %v1384 = vadd.f32 %v1382, %v1348
        %v1385 = vadd.f32 %v1383, %v1351
        %v1386 = vadd.f32 %v1384, %v1356
        %v1387 = vadd.f32 %v1385, %v1359
        %v1388 = vadd.f32 %v1386, %v1364
        %v1389 = vadd.f32 %v1387, %v1367
        %v1390 = vadd.f32 %v1388, %v1372
        %v1391 = vadd.f32 %v1389, %v1375
        %1392 = vst [vmem:[%s284] sm:$0xff] %v1390
        %1393 = vst [vmem:[%s284 + $0x8] sm:$0xff] %v1391
        %s1394 = sand.u32 %s127, 1
        %s1395 = scalar_lea.sflag [#allocation4], %s1394
        %s1396 = sand.u32 %s127, 1
        %s1397 = smul.addr %s1396, 16
        %s1398 = scalar_lea.vmem [#allocation10], %s1397
        // Predicated region
        $region53: #{tpu_custom_call.1} parent=35 // pred_check
          %p1399 = pneg %p137
        $region54: #{tpu_custom_call.1} parent=35 // pred_check_branch
          %1401 = sbr.rel (%p1399) target = $region56
        $region55: #{tpu_custom_call.1} parent=35 // pred_region
          %s1403 = ssub.s32 256, 256
          %1404 = vsyncadd %s1395, %s1403
          %s1405 = smul.addr %s25, 2
          %s1406 = smul.addr %s1405, 128
          %s1407 = scalar_lea.hbm %s4, %s1406
          %s1408 = sshll.u32 %s1398, 4
          %s1409 = int_to_ptr.vmem [resolvable:$true] %s1408
          %1414 = dma.vmem_to_hbm [thread:$0]  %s1409, 256, %s1407, %s1395, 128, 128, 8
        $region56: #{tpu_custom_call.1} parent=35 // pred_fallthru
          _
      $region36: #{tpu_custom_call.1} parent=5 // pred_fallthru
        _
      %p1415 = scmp.le.s32.totalorder 2, %s20
      // Predicated region
      $region57: #{tpu_custom_call.1} parent=5 // pred_check
        %p1416 = pneg %p1415
      $region58: #{tpu_custom_call.1} parent=5 // pred_check_branch
        %1418 = sbr.rel (%p1416) target = $region60
      $region59: #{tpu_custom_call.1} parent=5 // pred_region
        %s1419 = ssub.s32 %s20, 2
        // Predicated region
        $region61: #{tpu_custom_call.1} parent=59 // pred_check
          %p1420 = pneg %p143
        $region62: #{tpu_custom_call.1} parent=59 // pred_check_branch
          %1422 = sbr.rel (%p1420) target = $region64
        $region63: #{tpu_custom_call.1} parent=59 // pred_region
          %s1423 = sand.u32 %s128, 1
          %s1424 = scalar_lea.sflag [#allocation4], %s1423
          %s1425 = sand.u32 %s128, 1
          %s1426 = smul.addr %s1425, 16
          %s1427 = scalar_lea.vmem [#allocation10], %s1426
          %1428 = dma.done %s1424, 256
        $region64: #{tpu_custom_call.1} parent=59 // pred_fallthru
          _
      $region60: #{tpu_custom_call.1} parent=5 // pred_fallthru
        _
    $region6: #{tpu_custom_call.1} parent=1 // loop_footer
      %s24 = sadd.s32 1, %s20
    $region7: #{tpu_custom_call.1} parent=1 // loop_footer_branch
      %19 = sbr.rel target = $region3
    $region8: #{tpu_custom_call.1} parent=1 // loop_exit
      _
    %1429 = vsyncpa [#allocation3], 1
    %s1430 = scalar_lea.sflag [#allocation3], 1
    %1431 = vsyncpa %s1430, 1
    %1432 = vsyncpa [#allocation6], 1
    %1433 = vsyncpa [#allocation9], 1
    %s1434 = scalar_lea.sflag [#allocation9], 1
    %1435 = vsyncpa %s1434, 1
    %1436 = vsyncpa [#allocation4], 1
    %s1437 = scalar_lea.sflag [#allocation4], 1
    %1438 = vsyncpa %s1437, 1

</llo_original>
